<compile_context>
chip_gen: v6e
topology: v6e:2x2x1
jax: 0.10.0
libtpu: 0.0.40
codegen_flags: <defaults>
</compile_context>

<pallas_src>
import functools
import math

import jax
import jax.numpy as jnp
from jax import lax
from jax.experimental import pallas as pl
from jax.experimental.pallas import tpu as pltpu

# ---------------- small synthetic GPT-2 config ----------------
VOCAB = 64       # "resized" token embedding table size
N_POS = 16       # max positions
N_EMBD = 32      # hidden size D
N_HEAD = 2
N_LAYER = 2
BATCH = 2
SEQ = 8
LN_EPS = 1e-5
OUT_LANES = 128  # lane-dense output padding (wrapper slices column 0)


def _gelu_new(x):
    # GPT-2 "gelu_new" (tanh approximation)
    return 0.5 * x * (1.0 + jnp.tanh(0.7978845608028654 * (x + 0.044715 * x * x * x)))


def _layernorm(v, g, b):
    mu = jnp.mean(v, axis=-1, keepdims=True)
    var = jnp.mean((v - mu) ** 2, axis=-1, keepdims=True)
    return (v - mu) * lax.rsqrt(var + LN_EPS) * g + b


# ------------- fused Pallas kernel: all layers + ln_f + pool + head -------------
def _fused_kernel(x_emb_ref, bias_ref,
                  ln1g_ref, ln1b_ref, wqkv_ref, bqkv_ref, wo_ref, bo_ref,
                  ln2g_ref, ln2b_ref, wfc_ref, bfc_ref, wpr_ref, bpr_ref,
                  lnfg_ref, lnfb_ref, wh_ref,
                  o_ref, x_scratch, *, B, S, D, H, L):
    Dh = D // H
    l = pl.program_id(0)

    # Resident activation: load embeddings into VMEM scratch on the first layer.
    @pl.when(l == 0)
    def _():
        x_scratch[...] = x_emb_ref[...]

    x = x_scratch[...]                     # (B*S, D) f32, carried across the layer axis

    # ---- attention sub-block ----
    h1 = _layernorm(x, ln1g_ref[0], ln1b_ref[0])                              # (B*S, D) f32
    # Single fused QKV projection: (B*S, D) @ (D, 3D).  1/sqrt(Dh) is folded
    # into the Q columns of the weight at init.
    qkv = jnp.dot(h1.astype(jnp.bfloat16), wqkv_ref[0],
                  preferred_element_type=jnp.float32) + bqkv_ref[0]           # (B*S, 3D) f32

    # Per-(batch, head) scores/softmax/context.  B and H are tiny static
    # Python constants; all slices are static and sublane/lane aligned.
    ctx_rows = []
    for b in range(B):
        r0, r1 = b * S, (b + 1) * S
        bias_b = bias_ref[b]                                                  # (S, S) causal+pad
        head_ctx = []
        for h in range(H):
            c0 = h * Dh
            q = qkv[r0:r1, c0:c0 + Dh]                                        # (S, Dh) f32
            k = qkv[r0:r1, D + c0:D + c0 + Dh]
            v = qkv[r0:r1, 2 * D + c0:2 * D + c0 + Dh]
            s = jnp.einsum('qd,kd->qk', q.astype(jnp.bfloat16), k.astype(jnp.bfloat16),
                           preferred_element_type=jnp.float32) + bias_b       # (S, S) f32
            m = jnp.max(s, axis=-1, keepdims=True)
            p = jnp.exp(s - m)
            p = p * pl.reciprocal(jnp.sum(p, axis=-1, keepdims=True), approx=True)  # EUP
            head_ctx.append(jnp.dot(p.astype(jnp.bfloat16), v.astype(jnp.bfloat16),
                                    preferred_element_type=jnp.float32))      # (S, Dh) f32
        ctx_rows.append(jnp.concatenate(head_ctx, axis=-1))                   # (S, D) lane concat
    ctx = jnp.concatenate(ctx_rows, axis=0)                                   # (B*S, D) f32

    # Output projection as a single full-K matmul.
    attn = jnp.dot(ctx.astype(jnp.bfloat16), wo_ref[0],
                   preferred_element_type=jnp.float32) + bo_ref[0]            # (B*S, D) f32
    x = x + attn

    # ---- MLP sub-block ----
    h2 = _layernorm(x, ln2g_ref[0], ln2b_ref[0])
    fc = jnp.dot(h2.astype(jnp.bfloat16), wfc_ref[0],
                 preferred_element_type=jnp.float32) + bfc_ref[0]             # (B*S, 4D) f32
    act = _gelu_new(fc)
    mlp = jnp.dot(act.astype(jnp.bfloat16), wpr_ref[0],
                  preferred_element_type=jnp.float32) + bpr_ref[0]            # (B*S, D) f32
    x = x + mlp
    x_scratch[...] = x

    # ---- final ln_f + mean-pool + regression head, fused on the last layer ----
    @pl.when(l == L - 1)
    def _():
        hf = _layernorm(x, lnfg_ref[...], lnfb_ref[...])                      # (B*S, D)
        logits = []
        for b in range(B):
            pooled = jnp.mean(hf[b * S:(b + 1) * S], axis=0, keepdims=True)   # (1, D) == mean over seq
            # nn.Dropout(0.1): eval-mode identity (deterministic inference).
            logits.append(jnp.sum(pooled * wh_ref[...], axis=-1, keepdims=True))  # (1, 1) VPU mul + reduce
        logit = jnp.concatenate(logits, axis=0)                               # (B, 1)
        o_ref[...] = jnp.broadcast_to(logit, (B, OUT_LANES))                  # lane-dense store


def _make_fused_call(B, S, D, H, L):
    kern = functools.partial(_fused_kernel, B=B, S=S, D=D, H=H, L=L)

    def per_layer(shape):          # weights stacked with a leading layer axis, streamed once per layer
        n = len(shape)
        return pl.BlockSpec((1,) + shape, lambda l, _n=n: (l,) + (0,) * _n)

    def shared(shape):             # grid-invariant inputs, DMA'd once per call
        n = len(shape)
        return pl.BlockSpec(shape, lambda l, _n=n: (0,) * _n)

    in_specs = [
        shared((B * S, D)),                                   # token+pos embeddings (flattened)
        shared((B, S, S)),                                    # combined causal + padding bias
        per_layer((1, D)), per_layer((1, D)),                 # ln1 gamma / beta
        per_layer((D, 3 * D)), per_layer((1, 3 * D)),         # fused c_attn W / b (q-scale folded in)
        per_layer((D, D)), per_layer((1, D)),                 # attn c_proj W / b
        per_layer((1, D)), per_layer((1, D)),                 # ln2 gamma / beta
        per_layer((D, 4 * D)), per_layer((1, 4 * D)),         # mlp c_fc
        per_layer((4 * D, D)), per_layer((1, D)),             # mlp c_proj
        shared((1, D)), shared((1, D)),                       # ln_f gamma / beta
        shared((1, D)),                                       # regression head weight
    ]
    out_specs = pl.BlockSpec((B, OUT_LANES), lambda l: (0, 0))

    return pl.pallas_call(
        kern,
        out_shape=jax.ShapeDtypeStruct((B, OUT_LANES), jnp.float32),
        grid=(L,),
        in_specs=in_specs,
        out_specs=out_specs,
        scratch_shapes=[pltpu.VMEM((B * S, D), jnp.float32)],  # resident activation
        compiler_params=pltpu.CompilerParams(
            dimension_semantics=("arbitrary",)),               # layers are sequential
    )


# ---------------- deterministic parameter init ----------------
def init_params(key):
    D, H, L = N_EMBD, N_HEAD, N_LAYER
    Dh = D // H
    ks = jax.random.split(key, 3 + 4 * L)
    it = iter(range(len(ks)))
    scale = 1.0 / math.sqrt(Dh)

    p = {
        "wte": 0.02 * jax.random.normal(ks[next(it)], (VOCAB, D), jnp.float32),
        "wpe": 0.01 * jax.random.normal(ks[next(it)], (N_POS, D), jnp.float32),
        "ln1_g": jnp.ones((L, 1, D), jnp.float32),
        "ln1_b": jnp.zeros((L, 1, D), jnp.float32),
        "ln2_g": jnp.ones((L, 1, D), jnp.float32),
        "ln2_b": jnp.zeros((L, 1, D), jnp.float32),
        "lnf_g": jnp.ones((1, D), jnp.float32),
        "lnf_b": jnp.zeros((1, D), jnp.float32),
        # GPT-2 Conv1D biases are zero here (synthetic init); Q-bias would also
        # carry the folded 1/sqrt(Dh) scale if nonzero.
        "b_qkv": jnp.zeros((L, 1, 3 * D), jnp.float32),
        "b_o": jnp.zeros((L, 1, D), jnp.float32),
        "b_fc": jnp.zeros((L, 1, 4 * D), jnp.float32),
        "b_pr": jnp.zeros((L, 1, D), jnp.float32),
    }

    wqkv, wo, wfc, wpr = [], [], [], []
    for _ in range(L):
        w_attn = 0.02 * jax.random.normal(ks[next(it)], (D, 3 * D), jnp.float32)  # Conv1D (D, 3D)
        w_attn = w_attn.at[:, :D].multiply(scale)          # fold 1/sqrt(Dh) into Q columns
        wqkv.append(w_attn)
        wo.append(0.02 * jax.random.normal(ks[next(it)], (D, D), jnp.float32))
        wfc.append(0.02 * jax.random.normal(ks[next(it)], (D, 4 * D), jnp.float32))
        wpr.append(0.02 * jax.random.normal(ks[next(it)], (4 * D, D), jnp.float32))

    # Weight matrices feed the MXU -> store in bf16 (dense trailing dims 96/32/128).
    p["w_qkv"] = jnp.stack(wqkv).astype(jnp.bfloat16)   # (L, D, 3D)
    p["w_o"] = jnp.stack(wo).astype(jnp.bfloat16)       # (L, D, D)
    p["w_fc"] = jnp.stack(wfc).astype(jnp.bfloat16)     # (L, D, 4D)
    p["w_pr"] = jnp.stack(wpr).astype(jnp.bfloat16)     # (L, 4D, D)

    # regression head: xavier_uniform_ weight (1, D); zero bias (added in wrapper)
    limit = math.sqrt(6.0 / (D + 1))
    p["w_head"] = jax.random.uniform(ks[next(it)], (1, D), jnp.float32, -limit, limit)
    p["b_head"] = jnp.zeros((1,), jnp.float32)
    return p


# ---------------- forward pass ----------------
@functools.partial(jax.jit, static_argnames=("apply_sigmoid",))
def reward_model_forward(params, input_ids, attention_mask=None, apply_sigmoid=False):
    B, S = input_ids.shape
    D = N_EMBD
    if attention_mask is None:
        attention_mask = jnp.ones((B, S), jnp.float32)

    # glue: embedding lookups (gather) + position embeddings, flattened to (B*S, D)
    x = params["wte"][input_ids] + params["wpe"][jnp.arange(S)][None, :, :]
    x = x.reshape(B * S, D).astype(jnp.float32)

    # combined causal + padding additive bias, hoisted out of the kernel: (B, S, S)
    causal = jnp.where(jnp.arange(S)[:, None] >= jnp.arange(S)[None, :], 0.0, -1e9)
    pad = (1.0 - attention_mask.astype(jnp.float32)) * -1e9
    bias = (causal[None, :, :] + pad[:, None, :]).astype(jnp.float32)

    fused = _make_fused_call(B, S, D, N_HEAD, N_LAYER)
    out = fused(
        x, bias,
        params["ln1_g"], params["ln1_b"],
        params["w_qkv"], params["b_qkv"], params["w_o"], params["b_o"],
        params["ln2_g"], params["ln2_b"], params["w_fc"], params["b_fc"],
        params["w_pr"], params["b_pr"],
        params["lnf_g"], params["lnf_b"], params["w_head"],
    )
    # slice lane-padded output -> (B,), add tiny head bias on the scalar path (== .squeeze(-1))
    logits = out[:, 0] + params["b_head"][0]
    if apply_sigmoid:
        return jax.nn.sigmoid(logits)
    return logits
    # TODO(synk): pretrained GPT-2 checkpoint loading / tokenizer resize has no
    # in-kernel equivalent; weights are synthetic deterministic init.


if __name__ == "__main__":
    key = jax.random.PRNGKey(0)
    k_param, k_ids = jax.random.split(key)
    params = init_params(k_param)

    input_ids = jax.random.randint(k_ids, (BATCH, SEQ), 0, VOCAB, dtype=jnp.int32)
    attention_mask = jnp.ones((BATCH, SEQ), jnp.float32)

    logits = reward_model_forward(params, input_ids, attention_mask, apply_sigmoid=False)
    probs = reward_model_forward(params, input_ids, attention_mask, apply_sigmoid=True)
    jax.block_until_ready(logits)
    jax.block_until_ready(probs)

    assert logits.shape == (BATCH,) and probs.shape == (BATCH,)
    print("KERNEL_OK")
</pallas_src>

<mosaic_0001>
module attributes {stable_mosaic.version = 11 : i64} {
  func.func @_fused_kernel(%arg0: i32, %arg1: memref<16x32xf32, #tpu.memory_space<vmem>>, %arg2: memref<2x8x8xf32, #tpu.memory_space<vmem>>, %arg3: memref<1x1x32xf32, #tpu.memory_space<vmem>>, %arg4: memref<1x1x32xf32, #tpu.memory_space<vmem>>, %arg5: memref<1x32x96xbf16, #tpu.memory_space<vmem>>, %arg6: memref<1x1x96xf32, #tpu.memory_space<vmem>>, %arg7: memref<1x32x32xbf16, #tpu.memory_space<vmem>>, %arg8: memref<1x1x32xf32, #tpu.memory_space<vmem>>, %arg9: memref<1x1x32xf32, #tpu.memory_space<vmem>>, %arg10: memref<1x1x32xf32, #tpu.memory_space<vmem>>, %arg11: memref<1x32x128xbf16, #tpu.memory_space<vmem>>, %arg12: memref<1x1x128xf32, #tpu.memory_space<vmem>>, %arg13: memref<1x128x32xbf16, #tpu.memory_space<vmem>>, %arg14: memref<1x1x32xf32, #tpu.memory_space<vmem>>, %arg15: memref<1x32xf32, #tpu.memory_space<vmem>>, %arg16: memref<1x32xf32, #tpu.memory_space<vmem>>, %arg17: memref<1x32xf32, #tpu.memory_space<vmem>>, %arg18: memref<2x128xf32, #tpu.memory_space<vmem>>, %arg19: memref<16x32xf32, #tpu.memory_space<vmem>>) attributes {dimension_semantics = [#tpu.dimension_semantics<arbitrary>], iteration_bounds = array<i64: 2>, scalar_prefetch = 0 : i64, scratch_operands = 1 : i64, tpu.core_type = #tpu.core_type<tc>, window_params = [{pipeline_mode = #tpu.pipeline_mode<synchronous>, transform_indices = @transform_0, window_bounds = array<i64: 16, 32>}, {pipeline_mode = #tpu.pipeline_mode<synchronous>, transform_indices = @transform_1, window_bounds = array<i64: 2, 8, 8>}, {transform_indices = @transform_2, window_bounds = array<i64: 1, 1, 32>}, {transform_indices = @transform_3, window_bounds = array<i64: 1, 1, 32>}, {transform_indices = @transform_4, window_bounds = array<i64: 1, 32, 96>}, {transform_indices = @transform_5, window_bounds = array<i64: 1, 1, 96>}, {transform_indices = @transform_6, window_bounds = array<i64: 1, 32, 32>}, {transform_indices = @transform_7, window_bounds = array<i64: 1, 1, 32>}, {transform_indices = @transform_8, window_bounds = array<i64: 1, 1, 32>}, {transform_indices = @transform_9, window_bounds = array<i64: 1, 1, 32>}, {transform_indices = @transform_10, window_bounds = array<i64: 1, 32, 128>}, {transform_indices = @transform_11, window_bounds = array<i64: 1, 1, 128>}, {transform_indices = @transform_12, window_bounds = array<i64: 1, 128, 32>}, {transform_indices = @transform_13, window_bounds = array<i64: 1, 1, 32>}, {pipeline_mode = #tpu.pipeline_mode<synchronous>, transform_indices = @transform_14, window_bounds = array<i64: 1, 32>}, {pipeline_mode = #tpu.pipeline_mode<synchronous>, transform_indices = @transform_15, window_bounds = array<i64: 1, 32>}, {pipeline_mode = #tpu.pipeline_mode<synchronous>, transform_indices = @transform_16, window_bounds = array<i64: 1, 32>}, {pipeline_mode = #tpu.pipeline_mode<synchronous>, transform_indices = @transform_17, window_bounds = array<i64: 2, 128>}]} {
    %c0_i32 = arith.constant 0 : i32
    %0 = arith.cmpi eq, %arg0, %c0_i32 : i32
    %1 = arith.extui %0 : i1 to i32
    %c0_i32_0 = arith.constant 0 : i32
    %2 = arith.cmpi ne, %1, %c0_i32_0 : i32
    scf.if %2 {
      %c0_79 = arith.constant 0 : index
      %c0_80 = arith.constant 0 : index
      %194 = vector.load %arg1[%c0_79, %c0_80] : memref<16x32xf32, #tpu.memory_space<vmem>>, vector<16x32xf32>
      %c0_81 = arith.constant 0 : index
      %c0_82 = arith.constant 0 : index
      %195 = vector.load %arg19[%c0_81, %c0_82] : memref<16x32xf32, #tpu.memory_space<vmem>>, vector<16x32xf32>
      tpu.vector_store %arg19[%c0_81, %c0_82], %194 {strides = array<i32>} : memref<16x32xf32, #tpu.memory_space<vmem>>, vector<16x32xf32>,
    } else {
    }
    %c0 = arith.constant 0 : index
    %c0_1 = arith.constant 0 : index
    %3 = vector.load %arg19[%c0, %c0_1] : memref<16x32xf32, #tpu.memory_space<vmem>>, vector<16x32xf32>
    %c0_2 = arith.constant 0 : index
    %c0_3 = arith.constant 0 : index
    %c0_4 = arith.constant 0 : index
    %4 = vector.load %arg3[%c0_2, %c0_3, %c0_4] : memref<1x1x32xf32, #tpu.memory_space<vmem>>, vector<1x1x32xf32>
    %5 = vector.shape_cast %4 : vector<1x1x32xf32> to vector<1x32xf32>
    %c0_5 = arith.constant 0 : index
    %c0_6 = arith.constant 0 : index
    %c0_7 = arith.constant 0 : index
    %6 = vector.load %arg4[%c0_5, %c0_6, %c0_7] : memref<1x1x32xf32, #tpu.memory_space<vmem>>, vector<1x1x32xf32>
    %7 = vector.shape_cast %6 : vector<1x1x32xf32> to vector<1x32xf32>
    %cst = arith.constant dense<0.000000e+00> : vector<16xf32>
    %8 = vector.multi_reduction <add>, %3, %cst [1] : vector<16x32xf32> to vector<16xf32>
    %9 = vector.shape_cast %8 : vector<16xf32> to vector<16x1xf32>
    %cst_8 = arith.constant 3.200000e+01 : f32
    %10 = vector.broadcast %cst_8 : f32 to vector<16x1xf32>
    %11 = arith.divf %9, %10 : vector<16x1xf32>
    %12 = vector.broadcast %11 : vector<16x1xf32> to vector<16x32xf32>
    %13 = arith.subf %3, %12 : vector<16x32xf32>
    %14 = arith.mulf %13, %13 : vector<16x32xf32>
    %cst_9 = arith.constant dense<0.000000e+00> : vector<16xf32>
    %15 = vector.multi_reduction <add>, %14, %cst_9 [1] : vector<16x32xf32> to vector<16xf32>
    %16 = vector.shape_cast %15 : vector<16xf32> to vector<16x1xf32>
    %cst_10 = arith.constant 3.200000e+01 : f32
    %17 = vector.broadcast %cst_10 : f32 to vector<16x1xf32>
    %18 = arith.divf %16, %17 : vector<16x1xf32>
    %19 = vector.broadcast %11 : vector<16x1xf32> to vector<16x32xf32>
    %20 = arith.subf %3, %19 : vector<16x32xf32>
    %cst_11 = arith.constant 9.99999974E-6 : f32
    %21 = vector.broadcast %cst_11 : f32 to vector<16x1xf32>
    %22 = arith.addf %18, %21 : vector<16x1xf32>
    %23 = math.rsqrt %22 : vector<16x1xf32>
    %24 = vector.broadcast %23 : vector<16x1xf32> to vector<16x32xf32>
    %25 = arith.mulf %20, %24 : vector<16x32xf32>
    %26 = vector.broadcast %5 : vector<1x32xf32> to vector<16x32xf32>
    %27 = arith.mulf %25, %26 : vector<16x32xf32>
    %28 = vector.broadcast %7 : vector<1x32xf32> to vector<16x32xf32>
    %29 = arith.addf %27, %28 : vector<16x32xf32>
    %30 = arith.truncf %29 : vector<16x32xf32> to vector<16x32xbf16>
    %c0_12 = arith.constant 0 : index
    %c0_13 = arith.constant 0 : index
    %c0_14 = arith.constant 0 : index
    %31 = vector.load %arg5[%c0_12, %c0_13, %c0_14] : memref<1x32x96xbf16, #tpu.memory_space<vmem>>, vector<1x32x96xbf16>
    %32 = vector.shape_cast %31 : vector<1x32x96xbf16> to vector<32x96xbf16>
    %cst_15 = arith.constant dense<0.000000e+00> : vector<16x96xf32>
    %33 = tpu.matmul %30, %32, %cst_15 {dimension_numbers = #tpu.dot_dimension_numbers<[1], [0], [0], [1], [0, 0, 1, 1], [], []>} : vector<16x32xbf16>, vector<32x96xbf16>, vector<16x96xf32> -> vector<16x96xf32>
    %c0_16 = arith.constant 0 : index
    %c0_17 = arith.constant 0 : index
    %c0_18 = arith.constant 0 : index
    %34 = vector.load %arg6[%c0_16, %c0_17, %c0_18] : memref<1x1x96xf32, #tpu.memory_space<vmem>>, vector<1x1x96xf32>
    %35 = vector.shape_cast %34 : vector<1x1x96xf32> to vector<1x96xf32>
    %36 = vector.broadcast %35 : vector<1x96xf32> to vector<16x96xf32>
    %37 = arith.addf %33, %36 : vector<16x96xf32>
    %c0_19 = arith.constant 0 : index
    %c0_20 = arith.constant 0 : index
    %c0_21 = arith.constant 0 : index
    %38 = vector.load %arg2[%c0_19, %c0_20, %c0_21] : memref<2x8x8xf32, #tpu.memory_space<vmem>>, vector<1x8x8xf32>
    %39 = vector.shape_cast %38 : vector<1x8x8xf32> to vector<8x8xf32>
    %40 = vector.extract_strided_slice %37 {offsets = [0, 0], sizes = [8, 16], strides = [1, 1]} : vector<16x96xf32> to vector<8x16xf32>
    %41 = vector.extract_strided_slice %37 {offsets = [0, 32], sizes = [8, 16], strides = [1, 1]} : vector<16x96xf32> to vector<8x16xf32>
    %42 = vector.extract_strided_slice %37 {offsets = [0, 64], sizes = [8, 16], strides = [1, 1]} : vector<16x96xf32> to vector<8x16xf32>
    %43 = arith.truncf %40 : vector<8x16xf32> to vector<8x16xbf16>
    %44 = arith.truncf %41 : vector<8x16xf32> to vector<8x16xbf16>
    "tpu.trace_start"() <{level = 10 : i32, message = "qd,kd->qk"}> : () -> ()
    %cst_22 = arith.constant dense<0.000000e+00> : vector<8x8xf32>
    %45 = tpu.matmul %43, %44, %cst_22 {dimension_numbers = #tpu.dot_dimension_numbers<[1], [1], [0], [0], [0, 0, 1, 0], [], []>} : vector<8x16xbf16>, vector<8x16xbf16>, vector<8x8xf32> -> vector<8x8xf32>
    "tpu.trace_stop"() : () -> ()
    %46 = arith.addf %45, %39 : vector<8x8xf32>
    %cst_23 = arith.constant dense<0xFF800000> : vector<8xf32>
    %47 = vector.multi_reduction <maximumf>, %46, %cst_23 [1] : vector<8x8xf32> to vector<8xf32>
    %48 = vector.shape_cast %47 : vector<8xf32> to vector<8x1xf32>
    %49 = vector.broadcast %48 : vector<8x1xf32> to vector<8x8xf32>
    %50 = arith.subf %46, %49 : vector<8x8xf32>
    %51 = math.exp %50 : vector<8x8xf32>
    %cst_24 = arith.constant dense<0.000000e+00> : vector<8xf32>
    %52 = vector.multi_reduction <add>, %51, %cst_24 [1] : vector<8x8xf32> to vector<8xf32>
    %53 = vector.shape_cast %52 : vector<8xf32> to vector<8x1xf32>
    %54 = tpu.reciprocal %53 {approx = true} : vector<8x1xf32> -> vector<8x1xf32>
    %55 = vector.broadcast %54 : vector<8x1xf32> to vector<8x8xf32>
    %56 = arith.mulf %51, %55 : vector<8x8xf32>
    %57 = arith.truncf %56 : vector<8x8xf32> to vector<8x8xbf16>
    %58 = arith.truncf %42 : vector<8x16xf32> to vector<8x16xbf16>
    %cst_25 = arith.constant dense<0.000000e+00> : vector<8x16xf32>
    %59 = tpu.matmul %57, %58, %cst_25 {dimension_numbers = #tpu.dot_dimension_numbers<[1], [0], [0], [1], [0, 0, 1, 1], [], []>} : vector<8x8xbf16>, vector<8x16xbf16>, vector<8x16xf32> -> vector<8x16xf32>
    %60 = vector.extract_strided_slice %37 {offsets = [0, 16], sizes = [8, 16], strides = [1, 1]} : vector<16x96xf32> to vector<8x16xf32>
    %61 = vector.extract_strided_slice %37 {offsets = [0, 48], sizes = [8, 16], strides = [1, 1]} : vector<16x96xf32> to vector<8x16xf32>
    %62 = vector.extract_strided_slice %37 {offsets = [0, 80], sizes = [8, 16], strides = [1, 1]} : vector<16x96xf32> to vector<8x16xf32>
    %63 = arith.truncf %60 : vector<8x16xf32> to vector<8x16xbf16>
    %64 = arith.truncf %61 : vector<8x16xf32> to vector<8x16xbf16>
    "tpu.trace_start"() <{level = 10 : i32, message = "qd,kd->qk"}> : () -> ()
    %cst_26 = arith.constant dense<0.000000e+00> : vector<8x8xf32>
    %65 = tpu.matmul %63, %64, %cst_26 {dimension_numbers = #tpu.dot_dimension_numbers<[1], [1], [0], [0], [0, 0, 1, 0], [], []>} : vector<8x16xbf16>, vector<8x16xbf16>, vector<8x8xf32> -> vector<8x8xf32>
    "tpu.trace_stop"() : () -> ()
    %66 = arith.addf %65, %39 : vector<8x8xf32>
    %cst_27 = arith.constant dense<0xFF800000> : vector<8xf32>
    %67 = vector.multi_reduction <maximumf>, %66, %cst_27 [1] : vector<8x8xf32> to vector<8xf32>
    %68 = vector.shape_cast %67 : vector<8xf32> to vector<8x1xf32>
    %69 = vector.broadcast %68 : vector<8x1xf32> to vector<8x8xf32>
    %70 = arith.subf %66, %69 : vector<8x8xf32>
    %71 = math.exp %70 : vector<8x8xf32>
    %cst_28 = arith.constant dense<0.000000e+00> : vector<8xf32>
    %72 = vector.multi_reduction <add>, %71, %cst_28 [1] : vector<8x8xf32> to vector<8xf32>
    %73 = vector.shape_cast %72 : vector<8xf32> to vector<8x1xf32>
    %74 = tpu.reciprocal %73 {approx = true} : vector<8x1xf32> -> vector<8x1xf32>
    %75 = vector.broadcast %74 : vector<8x1xf32> to vector<8x8xf32>
    %76 = arith.mulf %71, %75 : vector<8x8xf32>
    %77 = arith.truncf %76 : vector<8x8xf32> to vector<8x8xbf16>
    %78 = arith.truncf %62 : vector<8x16xf32> to vector<8x16xbf16>
    %cst_29 = arith.constant dense<0.000000e+00> : vector<8x16xf32>
    %79 = tpu.matmul %77, %78, %cst_29 {dimension_numbers = #tpu.dot_dimension_numbers<[1], [0], [0], [1], [0, 0, 1, 1], [], []>} : vector<8x8xbf16>, vector<8x16xbf16>, vector<8x16xf32> -> vector<8x16xf32>
    %80 = tpu.concatenate %59, %79 in 1 : vector<8x16xf32>, vector<8x16xf32> -> vector<8x32xf32>
    %c1 = arith.constant 1 : index
    %c0_30 = arith.constant 0 : index
    %c0_31 = arith.constant 0 : index
    %81 = vector.load %arg2[%c1, %c0_30, %c0_31] : memref<2x8x8xf32, #tpu.memory_space<vmem>>, vector<1x8x8xf32>
    %82 = vector.shape_cast %81 : vector<1x8x8xf32> to vector<8x8xf32>
    %83 = vector.extract_strided_slice %37 {offsets = [8, 0], sizes = [8, 16], strides = [1, 1]} : vector<16x96xf32> to vector<8x16xf32>
    %84 = vector.extract_strided_slice %37 {offsets = [8, 32], sizes = [8, 16], strides = [1, 1]} : vector<16x96xf32> to vector<8x16xf32>
    %85 = vector.extract_strided_slice %37 {offsets = [8, 64], sizes = [8, 16], strides = [1, 1]} : vector<16x96xf32> to vector<8x16xf32>
    %86 = arith.truncf %83 : vector<8x16xf32> to vector<8x16xbf16>
    %87 = arith.truncf %84 : vector<8x16xf32> to vector<8x16xbf16>
    "tpu.trace_start"() <{level = 10 : i32, message = "qd,kd->qk"}> : () -> ()
    %cst_32 = arith.constant dense<0.000000e+00> : vector<8x8xf32>
    %88 = tpu.matmul %86, %87, %cst_32 {dimension_numbers = #tpu.dot_dimension_numbers<[1], [1], [0], [0], [0, 0, 1, 0], [], []>} : vector<8x16xbf16>, vector<8x16xbf16>, vector<8x8xf32> -> vector<8x8xf32>
    "tpu.trace_stop"() : () -> ()
    %89 = arith.addf %88, %82 : vector<8x8xf32>
    %cst_33 = arith.constant dense<0xFF800000> : vector<8xf32>
    %90 = vector.multi_reduction <maximumf>, %89, %cst_33 [1] : vector<8x8xf32> to vector<8xf32>
    %91 = vector.shape_cast %90 : vector<8xf32> to vector<8x1xf32>
    %92 = vector.broadcast %91 : vector<8x1xf32> to vector<8x8xf32>
    %93 = arith.subf %89, %92 : vector<8x8xf32>
    %94 = math.exp %93 : vector<8x8xf32>
    %cst_34 = arith.constant dense<0.000000e+00> : vector<8xf32>
    %95 = vector.multi_reduction <add>, %94, %cst_34 [1] : vector<8x8xf32> to vector<8xf32>
    %96 = vector.shape_cast %95 : vector<8xf32> to vector<8x1xf32>
    %97 = tpu.reciprocal %96 {approx = true} : vector<8x1xf32> -> vector<8x1xf32>
    %98 = vector.broadcast %97 : vector<8x1xf32> to vector<8x8xf32>
    %99 = arith.mulf %94, %98 : vector<8x8xf32>
    %100 = arith.truncf %99 : vector<8x8xf32> to vector<8x8xbf16>
    %101 = arith.truncf %85 : vector<8x16xf32> to vector<8x16xbf16>
    %cst_35 = arith.constant dense<0.000000e+00> : vector<8x16xf32>
    %102 = tpu.matmul %100, %101, %cst_35 {dimension_numbers = #tpu.dot_dimension_numbers<[1], [0], [0], [1], [0, 0, 1, 1], [], []>} : vector<8x8xbf16>, vector<8x16xbf16>, vector<8x16xf32> -> vector<8x16xf32>
    %103 = vector.extract_strided_slice %37 {offsets = [8, 16], sizes = [8, 16], strides = [1, 1]} : vector<16x96xf32> to vector<8x16xf32>
    %104 = vector.extract_strided_slice %37 {offsets = [8, 48], sizes = [8, 16], strides = [1, 1]} : vector<16x96xf32> to vector<8x16xf32>
    %105 = vector.extract_strided_slice %37 {offsets = [8, 80], sizes = [8, 16], strides = [1, 1]} : vector<16x96xf32> to vector<8x16xf32>
    %106 = arith.truncf %103 : vector<8x16xf32> to vector<8x16xbf16>
    %107 = arith.truncf %104 : vector<8x16xf32> to vector<8x16xbf16>
    "tpu.trace_start"() <{level = 10 : i32, message = "qd,kd->qk"}> : () -> ()
    %cst_36 = arith.constant dense<0.000000e+00> : vector<8x8xf32>
    %108 = tpu.matmul %106, %107, %cst_36 {dimension_numbers = #tpu.dot_dimension_numbers<[1], [1], [0], [0], [0, 0, 1, 0], [], []>} : vector<8x16xbf16>, vector<8x16xbf16>, vector<8x8xf32> -> vector<8x8xf32>
    "tpu.trace_stop"() : () -> ()
    %109 = arith.addf %108, %82 : vector<8x8xf32>
    %cst_37 = arith.constant dense<0xFF800000> : vector<8xf32>
    %110 = vector.multi_reduction <maximumf>, %109, %cst_37 [1] : vector<8x8xf32> to vector<8xf32>
    %111 = vector.shape_cast %110 : vector<8xf32> to vector<8x1xf32>
    %112 = vector.broadcast %111 : vector<8x1xf32> to vector<8x8xf32>
    %113 = arith.subf %109, %112 : vector<8x8xf32>
    %114 = math.exp %113 : vector<8x8xf32>
    %cst_38 = arith.constant dense<0.000000e+00> : vector<8xf32>
    %115 = vector.multi_reduction <add>, %114, %cst_38 [1] : vector<8x8xf32> to vector<8xf32>
    %116 = vector.shape_cast %115 : vector<8xf32> to vector<8x1xf32>
    %117 = tpu.reciprocal %116 {approx = true} : vector<8x1xf32> -> vector<8x1xf32>
    %118 = vector.broadcast %117 : vector<8x1xf32> to vector<8x8xf32>
    %119 = arith.mulf %114, %118 : vector<8x8xf32>
    %120 = arith.truncf %119 : vector<8x8xf32> to vector<8x8xbf16>
    %121 = arith.truncf %105 : vector<8x16xf32> to vector<8x16xbf16>
    %cst_39 = arith.constant dense<0.000000e+00> : vector<8x16xf32>
    %122 = tpu.matmul %120, %121, %cst_39 {dimension_numbers = #tpu.dot_dimension_numbers<[1], [0], [0], [1], [0, 0, 1, 1], [], []>} : vector<8x8xbf16>, vector<8x16xbf16>, vector<8x16xf32> -> vector<8x16xf32>
    %123 = tpu.concatenate %102, %122 in 1 : vector<8x16xf32>, vector<8x16xf32> -> vector<8x32xf32>
    %124 = tpu.concatenate %80, %123 in 0 : vector<8x32xf32>, vector<8x32xf32> -> vector<16x32xf32>
    %125 = arith.truncf %124 : vector<16x32xf32> to vector<16x32xbf16>
    %c0_40 = arith.constant 0 : index
    %c0_41 = arith.constant 0 : index
    %c0_42 = arith.constant 0 : index
    %126 = vector.load %arg7[%c0_40, %c0_41, %c0_42] : memref<1x32x32xbf16, #tpu.memory_space<vmem>>, vector<1x32x32xbf16>
    %127 = vector.shape_cast %126 : vector<1x32x32xbf16> to vector<32x32xbf16>
    %cst_43 = arith.constant dense<0.000000e+00> : vector<16x32xf32>
    %128 = tpu.matmul %125, %127, %cst_43 {dimension_numbers = #tpu.dot_dimension_numbers<[1], [0], [0], [1], [0, 0, 1, 1], [], []>} : vector<16x32xbf16>, vector<32x32xbf16>, vector<16x32xf32> -> vector<16x32xf32>
    %c0_44 = arith.constant 0 : index
    %c0_45 = arith.constant 0 : index
    %c0_46 = arith.constant 0 : index
    %129 = vector.load %arg8[%c0_44, %c0_45, %c0_46] : memref<1x1x32xf32, #tpu.memory_space<vmem>>, vector<1x1x32xf32>
    %130 = vector.shape_cast %129 : vector<1x1x32xf32> to vector<1x32xf32>
    %131 = vector.broadcast %130 : vector<1x32xf32> to vector<16x32xf32>
    %132 = arith.addf %128, %131 : vector<16x32xf32>
    %133 = arith.addf %3, %132 : vector<16x32xf32>
    %c0_47 = arith.constant 0 : index
    %c0_48 = arith.constant 0 : index
    %c0_49 = arith.constant 0 : index
    %134 = vector.load %arg9[%c0_47, %c0_48, %c0_49] : memref<1x1x32xf32, #tpu.memory_space<vmem>>, vector<1x1x32xf32>
    %135 = vector.shape_cast %134 : vector<1x1x32xf32> to vector<1x32xf32>
    %c0_50 = arith.constant 0 : index
    %c0_51 = arith.constant 0 : index
    %c0_52 = arith.constant 0 : index
    %136 = vector.load %arg10[%c0_50, %c0_51, %c0_52] : memref<1x1x32xf32, #tpu.memory_space<vmem>>, vector<1x1x32xf32>
    %137 = vector.shape_cast %136 : vector<1x1x32xf32> to vector<1x32xf32>
    %cst_53 = arith.constant dense<0.000000e+00> : vector<16xf32>
    %138 = vector.multi_reduction <add>, %133, %cst_53 [1] : vector<16x32xf32> to vector<16xf32>
    %139 = vector.shape_cast %138 : vector<16xf32> to vector<16x1xf32>
    %cst_54 = arith.constant 3.200000e+01 : f32
    %140 = vector.broadcast %cst_54 : f32 to vector<16x1xf32>
    %141 = arith.divf %139, %140 : vector<16x1xf32>
    %142 = vector.broadcast %141 : vector<16x1xf32> to vector<16x32xf32>
    %143 = arith.subf %133, %142 : vector<16x32xf32>
    %144 = arith.mulf %143, %143 : vector<16x32xf32>
    %cst_55 = arith.constant dense<0.000000e+00> : vector<16xf32>
    %145 = vector.multi_reduction <add>, %144, %cst_55 [1] : vector<16x32xf32> to vector<16xf32>
    %146 = vector.shape_cast %145 : vector<16xf32> to vector<16x1xf32>
    %cst_56 = arith.constant 3.200000e+01 : f32
    %147 = vector.broadcast %cst_56 : f32 to vector<16x1xf32>
    %148 = arith.divf %146, %147 : vector<16x1xf32>
    %149 = vector.broadcast %141 : vector<16x1xf32> to vector<16x32xf32>
    %150 = arith.subf %133, %149 : vector<16x32xf32>
    %cst_57 = arith.constant 9.99999974E-6 : f32
    %151 = vector.broadcast %cst_57 : f32 to vector<16x1xf32>
    %152 = arith.addf %148, %151 : vector<16x1xf32>
    %153 = math.rsqrt %152 : vector<16x1xf32>
    %154 = vector.broadcast %153 : vector<16x1xf32> to vector<16x32xf32>
    %155 = arith.mulf %150, %154 : vector<16x32xf32>
    %156 = vector.broadcast %135 : vector<1x32xf32> to vector<16x32xf32>
    %157 = arith.mulf %155, %156 : vector<16x32xf32>
    %158 = vector.broadcast %137 : vector<1x32xf32> to vector<16x32xf32>
    %159 = arith.addf %157, %158 : vector<16x32xf32>
    %160 = arith.truncf %159 : vector<16x32xf32> to vector<16x32xbf16>
    %c0_58 = arith.constant 0 : index
    %c0_59 = arith.constant 0 : index
    %c0_60 = arith.constant 0 : index
    %161 = vector.load %arg11[%c0_58, %c0_59, %c0_60] : memref<1x32x128xbf16, #tpu.memory_space<vmem>>, vector<1x32x128xbf16>
    %162 = vector.shape_cast %161 : vector<1x32x128xbf16> to vector<32x128xbf16>
    %cst_61 = arith.constant dense<0.000000e+00> : vector<16x128xf32>
    %163 = tpu.matmul %160, %162, %cst_61 {dimension_numbers = #tpu.dot_dimension_numbers<[1], [0], [0], [1], [0, 0, 1, 1], [], []>} : vector<16x32xbf16>, vector<32x128xbf16>, vector<16x128xf32> -> vector<16x128xf32>
    %c0_62 = arith.constant 0 : index
    %c0_63 = arith.constant 0 : index
    %c0_64 = arith.constant 0 : index
    %164 = vector.load %arg12[%c0_62, %c0_63, %c0_64] : memref<1x1x128xf32, #tpu.memory_space<vmem>>, vector<1x1x128xf32>
    %165 = vector.shape_cast %164 : vector<1x1x128xf32> to vector<1x128xf32>
    %166 = vector.broadcast %165 : vector<1x128xf32> to vector<16x128xf32>
    %167 = arith.addf %163, %166 : vector<16x128xf32>
    %cst_65 = arith.constant 5.000000e-01 : f32
    %168 = vector.broadcast %cst_65 : f32 to vector<16x128xf32>
    %169 = arith.mulf %168, %167 : vector<16x128xf32>
    %cst_66 = arith.constant 4.471500e-02 : f32
    %170 = vector.broadcast %cst_66 : f32 to vector<16x128xf32>
    %171 = arith.mulf %170, %167 : vector<16x128xf32>
    %172 = arith.mulf %171, %167 : vector<16x128xf32>
    %173 = arith.mulf %172, %167 : vector<16x128xf32>
    %174 = arith.addf %167, %173 : vector<16x128xf32>
    %cst_67 = arith.constant 0.797884583 : f32
    %175 = vector.broadcast %cst_67 : f32 to vector<16x128xf32>
    %176 = arith.mulf %175, %174 : vector<16x128xf32>
    %177 = math.tanh %176 : vector<16x128xf32>
    %cst_68 = arith.constant 1.000000e+00 : f32
    %178 = vector.broadcast %cst_68 : f32 to vector<16x128xf32>
    %179 = arith.addf %178, %177 : vector<16x128xf32>
    %180 = arith.mulf %169, %179 : vector<16x128xf32>
    %181 = arith.truncf %180 : vector<16x128xf32> to vector<16x128xbf16>
    %c0_69 = arith.constant 0 : index
    %c0_70 = arith.constant 0 : index
    %c0_71 = arith.constant 0 : index
    %182 = vector.load %arg13[%c0_69, %c0_70, %c0_71] : memref<1x128x32xbf16, #tpu.memory_space<vmem>>, vector<1x128x32xbf16>
    %183 = vector.shape_cast %182 : vector<1x128x32xbf16> to vector<128x32xbf16>
    %cst_72 = arith.constant dense<0.000000e+00> : vector<16x32xf32>
    %184 = tpu.matmul %181, %183, %cst_72 {dimension_numbers = #tpu.dot_dimension_numbers<[1], [0], [0], [1], [0, 0, 1, 1], [], []>} : vector<16x128xbf16>, vector<128x32xbf16>, vector<16x32xf32> -> vector<16x32xf32>
    %c0_73 = arith.constant 0 : index
    %c0_74 = arith.constant 0 : index
    %c0_75 = arith.constant 0 : index
    %185 = vector.load %arg14[%c0_73, %c0_74, %c0_75] : memref<1x1x32xf32, #tpu.memory_space<vmem>>, vector<1x1x32xf32>
    %186 = vector.shape_cast %185 : vector<1x1x32xf32> to vector<1x32xf32>
    %187 = vector.broadcast %186 : vector<1x32xf32> to vector<16x32xf32>
    %188 = arith.addf %184, %187 : vector<16x32xf32>
    %189 = arith.addf %133, %188 : vector<16x32xf32>
    %c0_76 = arith.constant 0 : index
    %c0_77 = arith.constant 0 : index
    %190 = vector.load %arg19[%c0_76, %c0_77] : memref<16x32xf32, #tpu.memory_space<vmem>>, vector<16x32xf32>
    tpu.vector_store %arg19[%c0_76, %c0_77], %189 {strides = array<i32>} : memref<16x32xf32, #tpu.memory_space<vmem>>, vector<16x32xf32>,
    %c1_i32 = arith.constant 1 : i32
    %191 = arith.cmpi eq, %arg0, %c1_i32 : i32
    %192 = arith.extui %191 : i1 to i32
    %c0_i32_78 = arith.constant 0 : i32
    %193 = arith.cmpi ne, %192, %c0_i32_78 : i32
    scf.if %193 {
      %c0_79 = arith.constant 0 : index
      %c0_80 = arith.constant 0 : index
      %194 = vector.load %arg15[%c0_79, %c0_80] : memref<1x32xf32, #tpu.memory_space<vmem>>, vector<1x32xf32>
      %c0_81 = arith.constant 0 : index
      %c0_82 = arith.constant 0 : index
      %195 = vector.load %arg16[%c0_81, %c0_82] : memref<1x32xf32, #tpu.memory_space<vmem>>, vector<1x32xf32>
      %cst_83 = arith.constant dense<0.000000e+00> : vector<16xf32>
      %196 = vector.multi_reduction <add>, %189, %cst_83 [1] : vector<16x32xf32> to vector<16xf32>
      %197 = vector.shape_cast %196 : vector<16xf32> to vector<16x1xf32>
      %cst_84 = arith.constant 3.200000e+01 : f32
      %198 = vector.broadcast %cst_84 : f32 to vector<16x1xf32>
      %199 = arith.divf %197, %198 : vector<16x1xf32>
      %200 = vector.broadcast %199 : vector<16x1xf32> to vector<16x32xf32>
      %201 = arith.subf %189, %200 : vector<16x32xf32>
      %202 = arith.mulf %201, %201 : vector<16x32xf32>
      %cst_85 = arith.constant dense<0.000000e+00> : vector<16xf32>
      %203 = vector.multi_reduction <add>, %202, %cst_85 [1] : vector<16x32xf32> to vector<16xf32>
      %204 = vector.shape_cast %203 : vector<16xf32> to vector<16x1xf32>
      %cst_86 = arith.constant 3.200000e+01 : f32
      %205 = vector.broadcast %cst_86 : f32 to vector<16x1xf32>
      %206 = arith.divf %204, %205 : vector<16x1xf32>
      %207 = vector.broadcast %199 : vector<16x1xf32> to vector<16x32xf32>
      %208 = arith.subf %189, %207 : vector<16x32xf32>
      %cst_87 = arith.constant 9.99999974E-6 : f32
      %209 = vector.broadcast %cst_87 : f32 to vector<16x1xf32>
      %210 = arith.addf %206, %209 : vector<16x1xf32>
      %211 = math.rsqrt %210 : vector<16x1xf32>
      %212 = vector.broadcast %211 : vector<16x1xf32> to vector<16x32xf32>
      %213 = arith.mulf %208, %212 : vector<16x32xf32>
      %214 = vector.broadcast %194 : vector<1x32xf32> to vector<16x32xf32>
      %215 = arith.mulf %213, %214 : vector<16x32xf32>
      %216 = vector.broadcast %195 : vector<1x32xf32> to vector<16x32xf32>
      %217 = arith.addf %215, %216 : vector<16x32xf32>
      %218 = vector.extract_strided_slice %217 {offsets = [0, 0], sizes = [8, 32], strides = [1, 1]} : vector<16x32xf32> to vector<8x32xf32>
      %cst_88 = arith.constant dense<0.000000e+00> : vector<32xf32>
      %219 = vector.multi_reduction <add>, %218, %cst_88 [0] : vector<8x32xf32> to vector<32xf32>
      %220 = vector.shape_cast %219 : vector<32xf32> to vector<1x32xf32>
      %cst_89 = arith.constant 8.000000e+00 : f32
      %221 = vector.broadcast %cst_89 : f32 to vector<1x32xf32>
      %222 = arith.divf %220, %221 : vector<1x32xf32>
      %c0_90 = arith.constant 0 : index
      %c0_91 = arith.constant 0 : index
      %223 = vector.load %arg17[%c0_90, %c0_91] : memref<1x32xf32, #tpu.memory_space<vmem>>, vector<1x32xf32>
      %224 = arith.mulf %222, %223 : vector<1x32xf32>
      %cst_92 = arith.constant dense<0.000000e+00> : vector<1xf32>
      %225 = vector.multi_reduction <add>, %224, %cst_92 [1] : vector<1x32xf32> to vector<1xf32>
      %226 = vector.shape_cast %225 : vector<1xf32> to vector<1x1xf32>
      %227 = vector.extract_strided_slice %217 {offsets = [8, 0], sizes = [8, 32], strides = [1, 1]} : vector<16x32xf32> to vector<8x32xf32>
      %cst_93 = arith.constant dense<0.000000e+00> : vector<32xf32>
      %228 = vector.multi_reduction <add>, %227, %cst_93 [0] : vector<8x32xf32> to vector<32xf32>
      %229 = vector.shape_cast %228 : vector<32xf32> to vector<1x32xf32>
      %cst_94 = arith.constant 8.000000e+00 : f32
      %230 = vector.broadcast %cst_94 : f32 to vector<1x32xf32>
      %231 = arith.divf %229, %230 : vector<1x32xf32>
      %c0_95 = arith.constant 0 : index
      %c0_96 = arith.constant 0 : index
      %232 = vector.load %arg17[%c0_95, %c0_96] : memref<1x32xf32, #tpu.memory_space<vmem>>, vector<1x32xf32>
      %233 = arith.mulf %231, %232 : vector<1x32xf32>
      %cst_97 = arith.constant dense<0.000000e+00> : vector<1xf32>
      %234 = vector.multi_reduction <add>, %233, %cst_97 [1] : vector<1x32xf32> to vector<1xf32>
      %235 = vector.shape_cast %234 : vector<1xf32> to vector<1x1xf32>
      %236 = tpu.concatenate %226, %235 in 0 : vector<1x1xf32>, vector<1x1xf32> -> vector<2x1xf32>
      %237 = vector.shape_cast %236 : vector<2x1xf32> to vector<2x1xf32>
      %238 = vector.broadcast %237 : vector<2x1xf32> to vector<2x128xf32>
      %c0_98 = arith.constant 0 : index
      %c0_99 = arith.constant 0 : index
      %239 = vector.load %arg18[%c0_98, %c0_99] : memref<2x128xf32, #tpu.memory_space<vmem>>, vector<2x128xf32>
      tpu.vector_store %arg18[%c0_98, %c0_99], %238 {strides = array<i32>} : memref<2x128xf32, #tpu.memory_space<vmem>>, vector<2x128xf32>,
    } else {
    }
    return
  }
  func.func @transform_0(%arg0: i32) -> (i32, i32) {
    %c0_i32 = arith.constant 0 : i32
    %c0_i32_0 = arith.constant 0 : i32
    %c0_i32_1 = arith.constant 0 : i32
    return %c0_i32, %c0_i32_0 : i32, i32
  }
  func.func @transform_1(%arg0: i32) -> (i32, i32, i32) {
    %c0_i32 = arith.constant 0 : i32
    %c0_i32_0 = arith.constant 0 : i32
    %c0_i32_1 = arith.constant 0 : i32
    %c0_i32_2 = arith.constant 0 : i32
    return %c0_i32, %c0_i32_0, %c0_i32_1 : i32, i32, i32
  }
  func.func @transform_2(%arg0: i32) -> (i32, i32, i32) {
    %c0_i32 = arith.constant 0 : i32
    %c0_i32_0 = arith.constant 0 : i32
    %c0_i32_1 = arith.constant 0 : i32
    return %arg0, %c0_i32, %c0_i32_0 : i32, i32, i32
  }
  func.func @transform_3(%arg0: i32) -> (i32, i32, i32) {
    %c0_i32 = arith.constant 0 : i32
    %c0_i32_0 = arith.constant 0 : i32
    %c0_i32_1 = arith.constant 0 : i32
    return %arg0, %c0_i32, %c0_i32_0 : i32, i32, i32
  }
  func.func @transform_4(%arg0: i32) -> (i32, i32, i32) {
    %c0_i32 = arith.constant 0 : i32
    %c0_i32_0 = arith.constant 0 : i32
    %c0_i32_1 = arith.constant 0 : i32
    return %arg0, %c0_i32, %c0_i32_0 : i32, i32, i32
  }
  func.func @transform_5(%arg0: i32) -> (i32, i32, i32) {
    %c0_i32 = arith.constant 0 : i32
    %c0_i32_0 = arith.constant 0 : i32
    %c0_i32_1 = arith.constant 0 : i32
    return %arg0, %c0_i32, %c0_i32_0 : i32, i32, i32
  }
  func.func @transform_6(%arg0: i32) -> (i32, i32, i32) {
    %c0_i32 = arith.constant 0 : i32
    %c0_i32_0 = arith.constant 0 : i32
    %c0_i32_1 = arith.constant 0 : i32
    return %arg0, %c0_i32, %c0_i32_0 : i32, i32, i32
  }
  func.func @transform_7(%arg0: i32) -> (i32, i32, i32) {
    %c0_i32 = arith.constant 0 : i32
    %c0_i32_0 = arith.constant 0 : i32
    %c0_i32_1 = arith.constant 0 : i32
    return %arg0, %c0_i32, %c0_i32_0 : i32, i32, i32
  }
  func.func @transform_8(%arg0: i32) -> (i32, i32, i32) {
    %c0_i32 = arith.constant 0 : i32
    %c0_i32_0 = arith.constant 0 : i32
    %c0_i32_1 = arith.constant 0 : i32
    return %arg0, %c0_i32, %c0_i32_0 : i32, i32, i32
  }
  func.func @transform_9(%arg0: i32) -> (i32, i32, i32) {
    %c0_i32 = arith.constant 0 : i32
    %c0_i32_0 = arith.constant 0 : i32
    %c0_i32_1 = arith.constant 0 : i32
    return %arg0, %c0_i32, %c0_i32_0 : i32, i32, i32
  }
  func.func @transform_10(%arg0: i32) -> (i32, i32, i32) {
    %c0_i32 = arith.constant 0 : i32
    %c0_i32_0 = arith.constant 0 : i32
    %c0_i32_1 = arith.constant 0 : i32
    return %arg0, %c0_i32, %c0_i32_0 : i32, i32, i32
  }
  func.func @transform_11(%arg0: i32) -> (i32, i32, i32) {
    %c0_i32 = arith.constant 0 : i32
    %c0_i32_0 = arith.constant 0 : i32
    %c0_i32_1 = arith.constant 0 : i32
    return %arg0, %c0_i32, %c0_i32_0 : i32, i32, i32
  }
  func.func @transform_12(%arg0: i32) -> (i32, i32, i32) {
    %c0_i32 = arith.constant 0 : i32
    %c0_i32_0 = arith.constant 0 : i32
    %c0_i32_1 = arith.constant 0 : i32
    return %arg0, %c0_i32, %c0_i32_0 : i32, i32, i32
  }
  func.func @transform_13(%arg0: i32) -> (i32, i32, i32) {
    %c0_i32 = arith.constant 0 : i32
    %c0_i32_0 = arith.constant 0 : i32
    %c0_i32_1 = arith.constant 0 : i32
    return %arg0, %c0_i32, %c0_i32_0 : i32, i32, i32
  }
  func.func @transform_14(%arg0: i32) -> (i32, i32) {
    %c0_i32 = arith.constant 0 : i32
    %c0_i32_0 = arith.constant 0 : i32
    %c0_i32_1 = arith.constant 0 : i32
    return %c0_i32, %c0_i32_0 : i32, i32
  }
  func.func @transform_15(%arg0: i32) -> (i32, i32) {
    %c0_i32 = arith.constant 0 : i32
    %c0_i32_0 = arith.constant 0 : i32
    %c0_i32_1 = arith.constant 0 : i32
    return %c0_i32, %c0_i32_0 : i32, i32
  }
  func.func @transform_16(%arg0: i32) -> (i32, i32) {
    %c0_i32 = arith.constant 0 : i32
    %c0_i32_0 = arith.constant 0 : i32
    %c0_i32_1 = arith.constant 0 : i32
    return %c0_i32, %c0_i32_0 : i32, i32
  }
  func.func @transform_17(%arg0: i32) -> (i32, i32) {
    %c0_i32 = arith.constant 0 : i32
    %c0_i32_0 = arith.constant 0 : i32
    %c0_i32_1 = arith.constant 0 : i32
    return %c0_i32, %c0_i32_0 : i32, i32
  }
}

</mosaic_0001>

<llo_original>
// kernel: reward_model_forward.1
$region0: #{reward_model_forward.1}
  #allocation0 [shape = 'u32[]', space=smem, size = 0x4, offset = 0x4, fixed_abs, tag = 'smem constant byte address 0x4 - core index']
  #allocation1 [shape = 'u32[144,128]{1,0:T(1,128)}', space=vmem, size = 0x12000, scoped, tag = 'internal scratch']
  #allocation2 [shape = 'f32[16,32]{1,0:T(8,128)}', space=vmem, size = 0x2000, scoped, tag = 'scratch operand']
  %s0 = inlined_call_operand.vmem [shape: f32[16,32], index: 0, kind: input, shape index: {}]
  %s1 = inlined_call_operand.vmem [shape: f32[2,8,8], index: 1, kind: input, shape index: {}]
  %s2 = inlined_call_operand.vmem [shape: f32[2,1,32], index: 2, kind: input, shape index: {}]
  %s3 = inlined_call_operand.vmem [shape: f32[2,1,32], index: 3, kind: input, shape index: {}]
  %s4 = inlined_call_operand.vmem [shape: bf16[2,32,96], index: 4, kind: input, shape index: {}]
  %s5 = inlined_call_operand.vmem [shape: f32[2,1,96], index: 5, kind: input, shape index: {}]
  %s6 = inlined_call_operand.vmem [shape: bf16[2,32,32], index: 6, kind: input, shape index: {}]
  %s7 = inlined_call_operand.vmem [shape: f32[2,1,32], index: 7, kind: input, shape index: {}]
  %s8 = inlined_call_operand.vmem [shape: f32[2,1,32], index: 8, kind: input, shape index: {}]
  %s9 = inlined_call_operand.vmem [shape: f32[2,1,32], index: 9, kind: input, shape index: {}]
  %s10 = inlined_call_operand.vmem [shape: bf16[2,32,128], index: 10, kind: input, shape index: {}]
  %s11 = inlined_call_operand.vmem [shape: f32[2,1,128], index: 11, kind: input, shape index: {}]
  %s12 = inlined_call_operand.vmem [shape: bf16[2,128,32], index: 12, kind: input, shape index: {}]
  %s13 = inlined_call_operand.vmem [shape: f32[2,1,32], index: 13, kind: input, shape index: {}]
  %s14 = inlined_call_operand.vmem [shape: f32[1,32], index: 14, kind: input, shape index: {}]
  %s15 = inlined_call_operand.vmem [shape: f32[1,32], index: 15, kind: input, shape index: {}]
  %s16 = inlined_call_operand.vmem [shape: f32[1,32], index: 16, kind: input, shape index: {}]
  %s17 = inlined_call_operand.vmem [shape: f32[2,128], index: 17, kind: output, shape index: {}]
  %s18 = sld [smem:[#allocation0]]
  $region109: #{reward_model_forward.1} parent=0
    _
  %s20 = ssub.s32 1, %s18
  %s21 = scalar_select 0, %s20, %s18
  loop: start=0, step=1, limit=4
  $region2: #{reward_model_forward.1} parent=0 // loop_pre_header
    _
  $region3: #{reward_model_forward.1} parent=0 // loop_header
    %s23 = sphi 0, %s27
    %p24 = scmp.ge.s32.totalorder %s23, 4
    %s31 = sphi 0, %s31
    %s33 = sphi 0, %s31
    %s34 = sphi 0, %s33
    %s48 = sphi 0, %s34
    %s52 = sphi 0, %s52
    %s54 = sphi 0, %s52
    %s55 = sphi 0, %s54
    %s69 = sphi 0, %s55
    %s75 = sphi 0, %s77
    %s78 = sphi 0, %s75
    %s79 = sphi 0, %s78
    %s95 = sphi 0, %s79
    %s101 = sphi 0, %s103
    %s104 = sphi 0, %s101
    %s105 = sphi 0, %s104
    %s121 = sphi 0, %s105
    %s127 = sphi 0, %s129
    %s130 = sphi 0, %s127
    %s131 = sphi 0, %s130
    %s147 = sphi 0, %s131
    %s153 = sphi 0, %s155
    %s156 = sphi 0, %s153
    %s157 = sphi 0, %s156
    %s173 = sphi 0, %s157
    %s179 = sphi 0, %s181
    %s182 = sphi 0, %s179
    %s183 = sphi 0, %s182
    %s199 = sphi 0, %s183
    %s205 = sphi 0, %s207
    %s208 = sphi 0, %s205
    %s209 = sphi 0, %s208
    %s225 = sphi 0, %s209
    %s231 = sphi 0, %s233
    %s234 = sphi 0, %s231
    %s235 = sphi 0, %s234
    %s251 = sphi 0, %s235
    %s257 = sphi 0, %s259
    %s260 = sphi 0, %s257
    %s261 = sphi 0, %s260
    %s277 = sphi 0, %s261
    %s283 = sphi 0, %s285
    %s286 = sphi 0, %s283
    %s287 = sphi 0, %s286
    %s303 = sphi 0, %s287
    %s309 = sphi 0, %s311
    %s312 = sphi 0, %s309
    %s313 = sphi 0, %s312
    %s329 = sphi 0, %s313
    %s335 = sphi 0, %s337
    %s338 = sphi 0, %s335
    %s339 = sphi 0, %s338
    %s355 = sphi 0, %s339
    %s361 = sphi 0, %s363
    %s364 = sphi 0, %s361
    %s365 = sphi 0, %s364
    %s381 = sphi 0, %s365
    %s385 = sphi 0, %s385
    %s387 = sphi 0, %s385
    %s388 = sphi 0, %s387
    %s402 = sphi 0, %s388
    %s406 = sphi 0, %s406
    %s408 = sphi 0, %s406
    %s409 = sphi 0, %s408
    %s423 = sphi 0, %s409
    %s427 = sphi 0, %s427
    %s429 = sphi 0, %s427
    %s430 = sphi 0, %s429
    %s444 = sphi 0, %s430
    %s448 = sphi 0, %s448
    %s450 = sphi 0, %s448
    %s451 = sphi 0, %s450
    %s465 = sphi 0, %s451
  $region4: #{reward_model_forward.1} parent=0 // loop_header_branch
    %26 = sbr.rel (%p24) target = $region8
  $region5: #{reward_model_forward.1} parent=0 // loop_body
    %s28 = ssub.s32 %s23, 1
    %s29 = ssub.s32 %s23, 2
    %s30 = sadd.s32 %s23, 1
    %s32 = sadd.s32 %s31, 1
    %p35 = scmp.eq.s32.totalorder %s23, 1
    %p36 = scmp.ne.s32.totalorder %s31, %s33
    %p37 = scmp.eq.s32.totalorder %s23, 0
    %p38 = por %p36, %p37
    %p39 = scmp.ne.s32.totalorder %s31, %s33
    %p40 = scmp.eq.s32.totalorder %s28, 1
    %p41 = por %p39, %p40
    %p42 = scmp.ne.s32.totalorder %s33, %s34
    %p43 = scmp.eq.s32.totalorder %s28, 0
    %p44 = por %p42, %p43
    %p45 = scmp.ne.s32.totalorder %s33, %s34
    %p46 = scmp.eq.s32.totalorder %s29, 1
    %p47 = por %p45, %p46
    %p49 = scmp.ne.s32.totalorder %s34, %s48
    %p50 = scmp.eq.s32.totalorder %s29, 0
    %p51 = por %p49, %p50
    %s53 = sadd.s32 %s52, 1
    %p56 = scmp.eq.s32.totalorder %s23, 1
    %p57 = scmp.ne.s32.totalorder %s52, %s54
    %p58 = scmp.eq.s32.totalorder %s23, 0
    %p59 = por %p57, %p58
    %p60 = scmp.ne.s32.totalorder %s52, %s54
    %p61 = scmp.eq.s32.totalorder %s28, 1
    %p62 = por %p60, %p61
    %p63 = scmp.ne.s32.totalorder %s54, %s55
    %p64 = scmp.eq.s32.totalorder %s28, 0
    %p65 = por %p63, %p64
    %p66 = scmp.ne.s32.totalorder %s54, %s55
    %p67 = scmp.eq.s32.totalorder %s29, 1
    %p68 = por %p66, %p67
    %p70 = scmp.ne.s32.totalorder %s55, %s69
    %p71 = scmp.eq.s32.totalorder %s29, 0
    %p72 = por %p70, %p71
    %s73 = ssub.s32 %s23, %s30
    %p74 = scmp.eq.s32.totalorder %s73, 0
    %s76 = sadd.s32 %s75, 1
    %s77 = scalar_select %p74, %s75, %s76
    %p80 = pneg %p74
    %p81 = scmp.eq.s32.totalorder %s23, 1
    %p82 = por %p80, %p81
    %p83 = scmp.ne.s32.totalorder %s75, %s78
    %p84 = scmp.eq.s32.totalorder %s23, 0
    %p85 = por %p83, %p84
    %p86 = scmp.ne.s32.totalorder %s75, %s78
    %p87 = scmp.eq.s32.totalorder %s28, 1
    %p88 = por %p86, %p87
    %p89 = scmp.ne.s32.totalorder %s78, %s79
    %p90 = scmp.eq.s32.totalorder %s28, 0
    %p91 = por %p89, %p90
    %p92 = scmp.ne.s32.totalorder %s78, %s79
    %p93 = scmp.eq.s32.totalorder %s29, 1
    %p94 = por %p92, %p93
    %p96 = scmp.ne.s32.totalorder %s79, %s95
    %p97 = scmp.eq.s32.totalorder %s29, 0
    %p98 = por %p96, %p97
    %s99 = ssub.s32 %s23, %s30
    %p100 = scmp.eq.s32.totalorder %s99, 0
    %s102 = sadd.s32 %s101, 1
    %s103 = scalar_select %p100, %s101, %s102
    %p106 = pneg %p100
    %p107 = scmp.eq.s32.totalorder %s23, 1
    %p108 = por %p106, %p107
    %p109 = scmp.ne.s32.totalorder %s101, %s104
    %p110 = scmp.eq.s32.totalorder %s23, 0
    %p111 = por %p109, %p110
    %p112 = scmp.ne.s32.totalorder %s101, %s104
    %p113 = scmp.eq.s32.totalorder %s28, 1
    %p114 = por %p112, %p113
    %p115 = scmp.ne.s32.totalorder %s104, %s105
    %p116 = scmp.eq.s32.totalorder %s28, 0
    %p117 = por %p115, %p116
    %p118 = scmp.ne.s32.totalorder %s104, %s105
    %p119 = scmp.eq.s32.totalorder %s29, 1
    %p120 = por %p118, %p119
    %p122 = scmp.ne.s32.totalorder %s105, %s121
    %p123 = scmp.eq.s32.totalorder %s29, 0
    %p124 = por %p122, %p123
    %s125 = ssub.s32 %s23, %s30
    %p126 = scmp.eq.s32.totalorder %s125, 0
    %s128 = sadd.s32 %s127, 1
    %s129 = scalar_select %p126, %s127, %s128
    %p132 = pneg %p126
    %p133 = scmp.eq.s32.totalorder %s23, 1
    %p134 = por %p132, %p133
    %p135 = scmp.ne.s32.totalorder %s127, %s130
    %p136 = scmp.eq.s32.totalorder %s23, 0
    %p137 = por %p135, %p136
    %p138 = scmp.ne.s32.totalorder %s127, %s130
    %p139 = scmp.eq.s32.totalorder %s28, 1
    %p140 = por %p138, %p139
    %p141 = scmp.ne.s32.totalorder %s130, %s131
    %p142 = scmp.eq.s32.totalorder %s28, 0
    %p143 = por %p141, %p142
    %p144 = scmp.ne.s32.totalorder %s130, %s131
    %p145 = scmp.eq.s32.totalorder %s29, 1
    %p146 = por %p144, %p145
    %p148 = scmp.ne.s32.totalorder %s131, %s147
    %p149 = scmp.eq.s32.totalorder %s29, 0
    %p150 = por %p148, %p149
    %s151 = ssub.s32 %s23, %s30
    %p152 = scmp.eq.s32.totalorder %s151, 0
    %s154 = sadd.s32 %s153, 1
    %s155 = scalar_select %p152, %s153, %s154
    %p158 = pneg %p152
    %p159 = scmp.eq.s32.totalorder %s23, 1
    %p160 = por %p158, %p159
    %p161 = scmp.ne.s32.totalorder %s153, %s156
    %p162 = scmp.eq.s32.totalorder %s23, 0
    %p163 = por %p161, %p162
    %p164 = scmp.ne.s32.totalorder %s153, %s156
    %p165 = scmp.eq.s32.totalorder %s28, 1
    %p166 = por %p164, %p165
    %p167 = scmp.ne.s32.totalorder %s156, %s157
    %p168 = scmp.eq.s32.totalorder %s28, 0
    %p169 = por %p167, %p168
    %p170 = scmp.ne.s32.totalorder %s156, %s157
    %p171 = scmp.eq.s32.totalorder %s29, 1
    %p172 = por %p170, %p171
    %p174 = scmp.ne.s32.totalorder %s157, %s173
    %p175 = scmp.eq.s32.totalorder %s29, 0
    %p176 = por %p174, %p175
    %s177 = ssub.s32 %s23, %s30
    %p178 = scmp.eq.s32.totalorder %s177, 0
    %s180 = sadd.s32 %s179, 1
    %s181 = scalar_select %p178, %s179, %s180
    %p184 = pneg %p178
    %p185 = scmp.eq.s32.totalorder %s23, 1
    %p186 = por %p184, %p185
    %p187 = scmp.ne.s32.totalorder %s179, %s182
    %p188 = scmp.eq.s32.totalorder %s23, 0
    %p189 = por %p187, %p188
    %p190 = scmp.ne.s32.totalorder %s179, %s182
    %p191 = scmp.eq.s32.totalorder %s28, 1
    %p192 = por %p190, %p191
    %p193 = scmp.ne.s32.totalorder %s182, %s183
    %p194 = scmp.eq.s32.totalorder %s28, 0
    %p195 = por %p193, %p194
    %p196 = scmp.ne.s32.totalorder %s182, %s183
    %p197 = scmp.eq.s32.totalorder %s29, 1
    %p198 = por %p196, %p197
    %p200 = scmp.ne.s32.totalorder %s183, %s199
    %p201 = scmp.eq.s32.totalorder %s29, 0
    %p202 = por %p200, %p201
    %s203 = ssub.s32 %s23, %s30
    %p204 = scmp.eq.s32.totalorder %s203, 0
    %s206 = sadd.s32 %s205, 1
    %s207 = scalar_select %p204, %s205, %s206
    %p210 = pneg %p204
    %p211 = scmp.eq.s32.totalorder %s23, 1
    %p212 = por %p210, %p211
    %p213 = scmp.ne.s32.totalorder %s205, %s208
    %p214 = scmp.eq.s32.totalorder %s23, 0
    %p215 = por %p213, %p214
    %p216 = scmp.ne.s32.totalorder %s205, %s208
    %p217 = scmp.eq.s32.totalorder %s28, 1
    %p218 = por %p216, %p217
    %p219 = scmp.ne.s32.totalorder %s208, %s209
    %p220 = scmp.eq.s32.totalorder %s28, 0
    %p221 = por %p219, %p220
    %p222 = scmp.ne.s32.totalorder %s208, %s209
    %p223 = scmp.eq.s32.totalorder %s29, 1
    %p224 = por %p222, %p223
    %p226 = scmp.ne.s32.totalorder %s209, %s225
    %p227 = scmp.eq.s32.totalorder %s29, 0
    %p228 = por %p226, %p227
    %s229 = ssub.s32 %s23, %s30
    %p230 = scmp.eq.s32.totalorder %s229, 0
    %s232 = sadd.s32 %s231, 1
    %s233 = scalar_select %p230, %s231, %s232
    %p236 = pneg %p230
    %p237 = scmp.eq.s32.totalorder %s23, 1
    %p238 = por %p236, %p237
    %p239 = scmp.ne.s32.totalorder %s231, %s234
    %p240 = scmp.eq.s32.totalorder %s23, 0
    %p241 = por %p239, %p240
    %p242 = scmp.ne.s32.totalorder %s231, %s234
    %p243 = scmp.eq.s32.totalorder %s28, 1
    %p244 = por %p242, %p243
    %p245 = scmp.ne.s32.totalorder %s234, %s235
    %p246 = scmp.eq.s32.totalorder %s28, 0
    %p247 = por %p245, %p246
    %p248 = scmp.ne.s32.totalorder %s234, %s235
    %p249 = scmp.eq.s32.totalorder %s29, 1
    %p250 = por %p248, %p249
    %p252 = scmp.ne.s32.totalorder %s235, %s251
    %p253 = scmp.eq.s32.totalorder %s29, 0
    %p254 = por %p252, %p253
    %s255 = ssub.s32 %s23, %s30
    %p256 = scmp.eq.s32.totalorder %s255, 0
    %s258 = sadd.s32 %s257, 1
    %s259 = scalar_select %p256, %s257, %s258
    %p262 = pneg %p256
    %p263 = scmp.eq.s32.totalorder %s23, 1
    %p264 = por %p262, %p263
    %p265 = scmp.ne.s32.totalorder %s257, %s260
    %p266 = scmp.eq.s32.totalorder %s23, 0
    %p267 = por %p265, %p266
    %p268 = scmp.ne.s32.totalorder %s257, %s260
    %p269 = scmp.eq.s32.totalorder %s28, 1
    %p270 = por %p268, %p269
    %p271 = scmp.ne.s32.totalorder %s260, %s261
    %p272 = scmp.eq.s32.totalorder %s28, 0
    %p273 = por %p271, %p272
    %p274 = scmp.ne.s32.totalorder %s260, %s261
    %p275 = scmp.eq.s32.totalorder %s29, 1
    %p276 = por %p274, %p275
    %p278 = scmp.ne.s32.totalorder %s261, %s277
    %p279 = scmp.eq.s32.totalorder %s29, 0
    %p280 = por %p278, %p279
    %s281 = ssub.s32 %s23, %s30
    %p282 = scmp.eq.s32.totalorder %s281, 0
    %s284 = sadd.s32 %s283, 1
    %s285 = scalar_select %p282, %s283, %s284
    %p288 = pneg %p282
    %p289 = scmp.eq.s32.totalorder %s23, 1
    %p290 = por %p288, %p289
    %p291 = scmp.ne.s32.totalorder %s283, %s286
    %p292 = scmp.eq.s32.totalorder %s23, 0
    %p293 = por %p291, %p292
    %p294 = scmp.ne.s32.totalorder %s283, %s286
    %p295 = scmp.eq.s32.totalorder %s28, 1
    %p296 = por %p294, %p295
    %p297 = scmp.ne.s32.totalorder %s286, %s287
    %p298 = scmp.eq.s32.totalorder %s28, 0
    %p299 = por %p297, %p298
    %p300 = scmp.ne.s32.totalorder %s286, %s287
    %p301 = scmp.eq.s32.totalorder %s29, 1
    %p302 = por %p300, %p301
    %p304 = scmp.ne.s32.totalorder %s287, %s303
    %p305 = scmp.eq.s32.totalorder %s29, 0
    %p306 = por %p304, %p305
    %s307 = ssub.s32 %s23, %s30
    %p308 = scmp.eq.s32.totalorder %s307, 0
    %s310 = sadd.s32 %s309, 1
    %s311 = scalar_select %p308, %s309, %s310
    %p314 = pneg %p308
    %p315 = scmp.eq.s32.totalorder %s23, 1
    %p316 = por %p314, %p315
    %p317 = scmp.ne.s32.totalorder %s309, %s312
    %p318 = scmp.eq.s32.totalorder %s23, 0
    %p319 = por %p317, %p318
    %p320 = scmp.ne.s32.totalorder %s309, %s312
    %p321 = scmp.eq.s32.totalorder %s28, 1
    %p322 = por %p320, %p321
    %p323 = scmp.ne.s32.totalorder %s312, %s313
    %p324 = scmp.eq.s32.totalorder %s28, 0
    %p325 = por %p323, %p324
    %p326 = scmp.ne.s32.totalorder %s312, %s313
    %p327 = scmp.eq.s32.totalorder %s29, 1
    %p328 = por %p326, %p327
    %p330 = scmp.ne.s32.totalorder %s313, %s329
    %p331 = scmp.eq.s32.totalorder %s29, 0
    %p332 = por %p330, %p331
    %s333 = ssub.s32 %s23, %s30
    %p334 = scmp.eq.s32.totalorder %s333, 0
    %s336 = sadd.s32 %s335, 1
    %s337 = scalar_select %p334, %s335, %s336
    %p340 = pneg %p334
    %p341 = scmp.eq.s32.totalorder %s23, 1
    %p342 = por %p340, %p341
    %p343 = scmp.ne.s32.totalorder %s335, %s338
    %p344 = scmp.eq.s32.totalorder %s23, 0
    %p345 = por %p343, %p344
    %p346 = scmp.ne.s32.totalorder %s335, %s338
    %p347 = scmp.eq.s32.totalorder %s28, 1
    %p348 = por %p346, %p347
    %p349 = scmp.ne.s32.totalorder %s338, %s339
    %p350 = scmp.eq.s32.totalorder %s28, 0
    %p351 = por %p349, %p350
    %p352 = scmp.ne.s32.totalorder %s338, %s339
    %p353 = scmp.eq.s32.totalorder %s29, 1
    %p354 = por %p352, %p353
    %p356 = scmp.ne.s32.totalorder %s339, %s355
    %p357 = scmp.eq.s32.totalorder %s29, 0
    %p358 = por %p356, %p357
    %s359 = ssub.s32 %s23, %s30
    %p360 = scmp.eq.s32.totalorder %s359, 0
    %s362 = sadd.s32 %s361, 1
    %s363 = scalar_select %p360, %s361, %s362
    %p366 = pneg %p360
    %p367 = scmp.eq.s32.totalorder %s23, 1
    %p368 = por %p366, %p367
    %p369 = scmp.ne.s32.totalorder %s361, %s364
    %p370 = scmp.eq.s32.totalorder %s23, 0
    %p371 = por %p369, %p370
    %p372 = scmp.ne.s32.totalorder %s361, %s364
    %p373 = scmp.eq.s32.totalorder %s28, 1
    %p374 = por %p372, %p373
    %p375 = scmp.ne.s32.totalorder %s364, %s365
    %p376 = scmp.eq.s32.totalorder %s28, 0
    %p377 = por %p375, %p376
    %p378 = scmp.ne.s32.totalorder %s364, %s365
    %p379 = scmp.eq.s32.totalorder %s29, 1
    %p380 = por %p378, %p379
    %p382 = scmp.ne.s32.totalorder %s365, %s381
    %p383 = scmp.eq.s32.totalorder %s29, 0
    %p384 = por %p382, %p383
    %s386 = sadd.s32 %s385, 1
    %p389 = scmp.eq.s32.totalorder %s23, 1
    %p390 = scmp.ne.s32.totalorder %s385, %s387
    %p391 = scmp.eq.s32.totalorder %s23, 0
    %p392 = por %p390, %p391
    %p393 = scmp.ne.s32.totalorder %s385, %s387
    %p394 = scmp.eq.s32.totalorder %s28, 1
    %p395 = por %p393, %p394
    %p396 = scmp.ne.s32.totalorder %s387, %s388
    %p397 = scmp.eq.s32.totalorder %s28, 0
    %p398 = por %p396, %p397
    %p399 = scmp.ne.s32.totalorder %s387, %s388
    %p400 = scmp.eq.s32.totalorder %s29, 1
    %p401 = por %p399, %p400
    %p403 = scmp.ne.s32.totalorder %s388, %s402
    %p404 = scmp.eq.s32.totalorder %s29, 0
    %p405 = por %p403, %p404
    %s407 = sadd.s32 %s406, 1
    %p410 = scmp.eq.s32.totalorder %s23, 1
    %p411 = scmp.ne.s32.totalorder %s406, %s408
    %p412 = scmp.eq.s32.totalorder %s23, 0
    %p413 = por %p411, %p412
    %p414 = scmp.ne.s32.totalorder %s406, %s408
    %p415 = scmp.eq.s32.totalorder %s28, 1
    %p416 = por %p414, %p415
    %p417 = scmp.ne.s32.totalorder %s408, %s409
    %p418 = scmp.eq.s32.totalorder %s28, 0
    %p419 = por %p417, %p418
    %p420 = scmp.ne.s32.totalorder %s408, %s409
    %p421 = scmp.eq.s32.totalorder %s29, 1
    %p422 = por %p420, %p421
    %p424 = scmp.ne.s32.totalorder %s409, %s423
    %p425 = scmp.eq.s32.totalorder %s29, 0
    %p426 = por %p424, %p425
    %s428 = sadd.s32 %s427, 1
    %p431 = scmp.eq.s32.totalorder %s23, 1
    %p432 = scmp.ne.s32.totalorder %s427, %s429
    %p433 = scmp.eq.s32.totalorder %s23, 0
    %p434 = por %p432, %p433
    %p435 = scmp.ne.s32.totalorder %s427, %s429
    %p436 = scmp.eq.s32.totalorder %s28, 1
    %p437 = por %p435, %p436
    %p438 = scmp.ne.s32.totalorder %s429, %s430
    %p439 = scmp.eq.s32.totalorder %s28, 0
    %p440 = por %p438, %p439
    %p441 = scmp.ne.s32.totalorder %s429, %s430
    %p442 = scmp.eq.s32.totalorder %s29, 1
    %p443 = por %p441, %p442
    %p445 = scmp.ne.s32.totalorder %s430, %s444
    %p446 = scmp.eq.s32.totalorder %s29, 0
    %p447 = por %p445, %p446
    %s449 = sadd.s32 %s448, 1
    %p452 = scmp.eq.s32.totalorder %s23, 1
    %p453 = scmp.ne.s32.totalorder %s448, %s450
    %p454 = scmp.eq.s32.totalorder %s23, 0
    %p455 = por %p453, %p454
    %p456 = scmp.ne.s32.totalorder %s448, %s450
    %p457 = scmp.eq.s32.totalorder %s28, 1
    %p458 = por %p456, %p457
    %p459 = scmp.ne.s32.totalorder %s450, %s451
    %p460 = scmp.eq.s32.totalorder %s28, 0
    %p461 = por %p459, %p460
    %p462 = scmp.ne.s32.totalorder %s450, %s451
    %p463 = scmp.eq.s32.totalorder %s29, 1
    %p464 = por %p462, %p463
    %p466 = scmp.ne.s32.totalorder %s451, %s465
    %p467 = scmp.eq.s32.totalorder %s29, 0
    %p468 = por %p466, %p467
    %p469 = scmp.le.s32.totalorder 1, %s23
    %p470 = scmp.lt.s32.totalorder %s23, 3
    %p471 = pnand %p469, %p470
    %p472 = pneg %p471
    // Predicated region
    $region9: #{reward_model_forward.1} parent=5 // pred_check
      _
    $region10: #{reward_model_forward.1} parent=5 // pred_check_branch
      %474 = sbr.rel (%p471) target = $region12
    $region11: #{reward_model_forward.1} parent=5 // pred_region
      %s475 = ssub.s32 %s23, 1
      // Predicated region
      $region13: #{reward_model_forward.1} parent=11 // pred_check
        %p476 = pneg %p44
      $region14: #{reward_model_forward.1} parent=11 // pred_check_branch
        %478 = sbr.rel (%p476) target = $region16
      $region15: #{reward_model_forward.1} parent=11 // pred_region
        _
      $region16: #{reward_model_forward.1} parent=11 // pred_fallthru
        _
      // Predicated region
      $region17: #{reward_model_forward.1} parent=11 // pred_check
        %p479 = pneg %p65
      $region18: #{reward_model_forward.1} parent=11 // pred_check_branch
        %481 = sbr.rel (%p479) target = $region20
      $region19: #{reward_model_forward.1} parent=11 // pred_region
        _
      $region20: #{reward_model_forward.1} parent=11 // pred_fallthru
        _
      // Predicated region
      $region21: #{reward_model_forward.1} parent=11 // pred_check
        %p482 = pneg %p398
      $region22: #{reward_model_forward.1} parent=11 // pred_check_branch
        %484 = sbr.rel (%p482) target = $region24
      $region23: #{reward_model_forward.1} parent=11 // pred_region
        _
      $region24: #{reward_model_forward.1} parent=11 // pred_fallthru
        _
      // Predicated region
      $region25: #{reward_model_forward.1} parent=11 // pred_check
        %p485 = pneg %p419
      $region26: #{reward_model_forward.1} parent=11 // pred_check_branch
        %487 = sbr.rel (%p485) target = $region28
      $region27: #{reward_model_forward.1} parent=11 // pred_region
        _
      $region28: #{reward_model_forward.1} parent=11 // pred_fallthru
        _
      // Predicated region
      $region29: #{reward_model_forward.1} parent=11 // pred_check
        %p488 = pneg %p440
      $region30: #{reward_model_forward.1} parent=11 // pred_check_branch
        %490 = sbr.rel (%p488) target = $region32
      $region31: #{reward_model_forward.1} parent=11 // pred_region
        _
      $region32: #{reward_model_forward.1} parent=11 // pred_fallthru
        _
    $region12: #{reward_model_forward.1} parent=5 // pred_fallthru
      _
    %p491 = scmp.lt.s32.totalorder %s23, 2
    // Predicated region
    $region33: #{reward_model_forward.1} parent=5 // pred_check
      %p492 = pneg %p491
    $region34: #{reward_model_forward.1} parent=5 // pred_check_branch
      %494 = sbr.rel (%p492) target = $region36
    $region35: #{reward_model_forward.1} parent=5 // pred_region
      // Predicated region
      $region37: #{reward_model_forward.1} parent=35 // pred_check
        %p495 = pneg %p85
      $region38: #{reward_model_forward.1} parent=35 // pred_check_branch
        %497 = sbr.rel (%p495) target = $region40
      $region39: #{reward_model_forward.1} parent=35 // pred_region
        %p498 = scmp.lt.s32.totalorder %s23, 1
        %s499 = scalar_select %p498, %s23, 1
        %s500 = scalar_lea.vmem %s2, %s499
      $region40: #{reward_model_forward.1} parent=35 // pred_fallthru
        _
      // Predicated region
      $region41: #{reward_model_forward.1} parent=35 // pred_check
        %p501 = pneg %p111
      $region42: #{reward_model_forward.1} parent=35 // pred_check_branch
        %503 = sbr.rel (%p501) target = $region44
      $region43: #{reward_model_forward.1} parent=35 // pred_region
        %p504 = scmp.lt.s32.totalorder %s23, 1
        %s505 = scalar_select %p504, %s23, 1
        %s506 = scalar_lea.vmem %s3, %s505
      $region44: #{reward_model_forward.1} parent=35 // pred_fallthru
        _
      // Predicated region
      $region45: #{reward_model_forward.1} parent=35 // pred_check
        %p507 = pneg %p137
      $region46: #{reward_model_forward.1} parent=35 // pred_check_branch
        %509 = sbr.rel (%p507) target = $region48
      $region47: #{reward_model_forward.1} parent=35 // pred_region
        %p510 = scmp.lt.s32.totalorder %s23, 1
        %s511 = scalar_select %p510, %s23, 1
        %s512 = smul.addr %s511, 4
        %s513 = smul.addr %s512, 4
        %s514 = scalar_lea.vmem %s4, %s513
      $region48: #{reward_model_forward.1} parent=35 // pred_fallthru
        _
      // Predicated region
      $region49: #{reward_model_forward.1} parent=35 // pred_check
        %p515 = pneg %p163
      $region50: #{reward_model_forward.1} parent=35 // pred_check_branch
        %517 = sbr.rel (%p515) target = $region52
      $region51: #{reward_model_forward.1} parent=35 // pred_region
        %p518 = scmp.lt.s32.totalorder %s23, 1
        %s519 = scalar_select %p518, %s23, 1
        %s520 = scalar_lea.vmem %s5, %s519
      $region52: #{reward_model_forward.1} parent=35 // pred_fallthru
        _
      // Predicated region
      $region53: #{reward_model_forward.1} parent=35 // pred_check
        %p521 = pneg %p189
      $region54: #{reward_model_forward.1} parent=35 // pred_check_branch
        %523 = sbr.rel (%p521) target = $region56
      $region55: #{reward_model_forward.1} parent=35 // pred_region
        %p524 = scmp.lt.s32.totalorder %s23, 1
        %s525 = scalar_select %p524, %s23, 1
        %s526 = smul.addr %s525, 4
        %s527 = smul.addr %s526, 4
        %s528 = scalar_lea.vmem %s6, %s527
      $region56: #{reward_model_forward.1} parent=35 // pred_fallthru
        _
      // Predicated region
      $region57: #{reward_model_forward.1} parent=35 // pred_check
        %p529 = pneg %p215
      $region58: #{reward_model_forward.1} parent=35 // pred_check_branch
        %531 = sbr.rel (%p529) target = $region60
      $region59: #{reward_model_forward.1} parent=35 // pred_region
        %p532 = scmp.lt.s32.totalorder %s23, 1
        %s533 = scalar_select %p532, %s23, 1
        %s534 = scalar_lea.vmem %s7, %s533
      $region60: #{reward_model_forward.1} parent=35 // pred_fallthru
        _
      // Predicated region
      $region61: #{reward_model_forward.1} parent=35 // pred_check
        %p535 = pneg %p241
      $region62: #{reward_model_forward.1} parent=35 // pred_check_branch
        %537 = sbr.rel (%p535) target = $region64
      $region63: #{reward_model_forward.1} parent=35 // pred_region
        %p538 = scmp.lt.s32.totalorder %s23, 1
        %s539 = scalar_select %p538, %s23, 1
        %s540 = scalar_lea.vmem %s8, %s539
      $region64: #{reward_model_forward.1} parent=35 // pred_fallthru
        _
      // Predicated region
      $region65: #{reward_model_forward.1} parent=35 // pred_check
        %p541 = pneg %p267
      $region66: #{reward_model_forward.1} parent=35 // pred_check_branch
        %543 = sbr.rel (%p541) target = $region68
      $region67: #{reward_model_forward.1} parent=35 // pred_region
        %p544 = scmp.lt.s32.totalorder %s23, 1
        %s545 = scalar_select %p544, %s23, 1
        %s546 = scalar_lea.vmem %s9, %s545
      $region68: #{reward_model_forward.1} parent=35 // pred_fallthru
        _
      // Predicated region
      $region69: #{reward_model_forward.1} parent=35 // pred_check
        %p547 = pneg %p293
      $region70: #{reward_model_forward.1} parent=35 // pred_check_branch
        %549 = sbr.rel (%p547) target = $region72
      $region71: #{reward_model_forward.1} parent=35 // pred_region
        %p550 = scmp.lt.s32.totalorder %s23, 1
        %s551 = scalar_select %p550, %s23, 1
        %s552 = smul.addr %s551, 4
        %s553 = smul.addr %s552, 4
        %s554 = scalar_lea.vmem %s10, %s553
      $region72: #{reward_model_forward.1} parent=35 // pred_fallthru
        _
      // Predicated region
      $region73: #{reward_model_forward.1} parent=35 // pred_check
        %p555 = pneg %p319
      $region74: #{reward_model_forward.1} parent=35 // pred_check_branch
        %557 = sbr.rel (%p555) target = $region76
      $region75: #{reward_model_forward.1} parent=35 // pred_region
        %p558 = scmp.lt.s32.totalorder %s23, 1
        %s559 = scalar_select %p558, %s23, 1
        %s560 = scalar_lea.vmem %s11, %s559
      $region76: #{reward_model_forward.1} parent=35 // pred_fallthru
        _
      // Predicated region
      $region77: #{reward_model_forward.1} parent=35 // pred_check
        %p561 = pneg %p345
      $region78: #{reward_model_forward.1} parent=35 // pred_check_branch
        %563 = sbr.rel (%p561) target = $region80
      $region79: #{reward_model_forward.1} parent=35 // pred_region
        %p564 = scmp.lt.s32.totalorder %s23, 1
        %s565 = scalar_select %p564, %s23, 1
        %s566 = smul.addr %s565, 16
        %s567 = smul.addr %s566, 4
        %s568 = scalar_lea.vmem %s12, %s567
      $region80: #{reward_model_forward.1} parent=35 // pred_fallthru
        _
      // Predicated region
      $region81: #{reward_model_forward.1} parent=35 // pred_check
        %p569 = pneg %p371
      $region82: #{reward_model_forward.1} parent=35 // pred_check_branch
        %571 = sbr.rel (%p569) target = $region84
      $region83: #{reward_model_forward.1} parent=35 // pred_region
        %p572 = scmp.lt.s32.totalorder %s23, 1
        %s573 = scalar_select %p572, %s23, 1
        %s574 = scalar_lea.vmem %s13, %s573
      $region84: #{reward_model_forward.1} parent=35 // pred_fallthru
        _
    $region36: #{reward_model_forward.1} parent=5 // pred_fallthru
      _
    %p575 = scmp.le.s32.totalorder 1, %s23
    %p576 = scmp.lt.s32.totalorder %s23, 3
    %p577 = pnand %p575, %p576
    %p578 = pneg %p577
    // Predicated region
    $region85: #{reward_model_forward.1} parent=5 // pred_check
      _
    $region86: #{reward_model_forward.1} parent=5 // pred_check_branch
      %580 = sbr.rel (%p577) target = $region88
    $region87: #{reward_model_forward.1} parent=5 // pred_region
      %s581 = ssub.s32 %s23, 1
      %p582 = pneg %p44
      %p583 = pneg %p41
      %p584 = pneg %p65
      %p585 = pneg %p62
      %p586 = scmp.lt.s32.totalorder %s28, 1
      %s587 = scalar_select %p586, %s28, 1
      %s588 = scalar_lea.vmem %s2, %s587
      %p589 = pneg %p91
      %p590 = pneg %p88
      %p591 = scmp.lt.s32.totalorder %s28, 1
      %s592 = scalar_select %p591, %s28, 1
      %s593 = scalar_lea.vmem %s3, %s592
      %p594 = pneg %p117
      %p595 = pneg %p114
      %p596 = scmp.lt.s32.totalorder %s28, 1
      %s597 = scalar_select %p596, %s28, 1
      %s598 = smul.addr %s597, 4
      %s599 = smul.addr %s598, 4
      %s600 = scalar_lea.vmem %s4, %s599
      %p601 = pneg %p143
      %p602 = pneg %p140
      %p603 = scmp.lt.s32.totalorder %s28, 1
      %s604 = scalar_select %p603, %s28, 1
      %s605 = scalar_lea.vmem %s5, %s604
      %p606 = pneg %p169
      %p607 = pneg %p166
      %p608 = scmp.lt.s32.totalorder %s28, 1
      %s609 = scalar_select %p608, %s28, 1
      %s610 = smul.addr %s609, 4
      %s611 = smul.addr %s610, 4
      %s612 = scalar_lea.vmem %s6, %s611
      %p613 = pneg %p195
      %p614 = pneg %p192
      %p615 = scmp.lt.s32.totalorder %s28, 1
      %s616 = scalar_select %p615, %s28, 1
      %s617 = scalar_lea.vmem %s7, %s616
      %p618 = pneg %p221
      %p619 = pneg %p218
      %p620 = scmp.lt.s32.totalorder %s28, 1
      %s621 = scalar_select %p620, %s28, 1
      %s622 = scalar_lea.vmem %s8, %s621
      %p623 = pneg %p247
      %p624 = pneg %p244
      %p625 = scmp.lt.s32.totalorder %s28, 1
      %s626 = scalar_select %p625, %s28, 1
      %s627 = scalar_lea.vmem %s9, %s626
      %p628 = pneg %p273
      %p629 = pneg %p270
      %p630 = scmp.lt.s32.totalorder %s28, 1
      %s631 = scalar_select %p630, %s28, 1
      %s632 = smul.addr %s631, 4
      %s633 = smul.addr %s632, 4
      %s634 = scalar_lea.vmem %s10, %s633
      %p635 = pneg %p299
      %p636 = pneg %p296
      %p637 = scmp.lt.s32.totalorder %s28, 1
      %s638 = scalar_select %p637, %s28, 1
      %s639 = scalar_lea.vmem %s11, %s638
      %p640 = pneg %p325
      %p641 = pneg %p322
      %p642 = scmp.lt.s32.totalorder %s28, 1
      %s643 = scalar_select %p642, %s28, 1
      %s644 = smul.addr %s643, 16
      %s645 = smul.addr %s644, 4
      %s646 = scalar_lea.vmem %s12, %s645
      %p647 = pneg %p351
      %p648 = pneg %p348
      %p649 = scmp.lt.s32.totalorder %s28, 1
      %s650 = scalar_select %p649, %s28, 1
      %s651 = scalar_lea.vmem %s13, %s650
      %p652 = pneg %p377
      %p653 = pneg %p374
      %p654 = pneg %p398
      %p655 = pneg %p395
      %p656 = pneg %p419
      %p657 = pneg %p416
      %p658 = pneg %p440
      %p659 = pneg %p437
      %p660 = pneg %p461
      %p661 = pneg %p458
      %p662 = scmp.lt.s32.totalorder %s28, 1
      %s663 = scalar_select %p662, %s28, 1
      %s664 = scalar_lea.vmem %s2, %s663
      %p665 = scmp.lt.s32.totalorder %s28, 1
      %s666 = scalar_select %p665, %s28, 1
      %s667 = scalar_lea.vmem %s3, %s666
      %p668 = scmp.lt.s32.totalorder %s28, 1
      %s669 = scalar_select %p668, %s28, 1
      %s670 = smul.addr %s669, 4
      %s671 = smul.addr %s670, 4
      %s672 = scalar_lea.vmem %s4, %s671
      %p673 = scmp.lt.s32.totalorder %s28, 1
      %s674 = scalar_select %p673, %s28, 1
      %s675 = scalar_lea.vmem %s5, %s674
      %p676 = scmp.lt.s32.totalorder %s28, 1
      %s677 = scalar_select %p676, %s28, 1
      %s678 = smul.addr %s677, 4
      %s679 = smul.addr %s678, 4
      %s680 = scalar_lea.vmem %s6, %s679
      %p681 = scmp.lt.s32.totalorder %s28, 1
      %s682 = scalar_select %p681, %s28, 1
      %s683 = scalar_lea.vmem %s7, %s682
      %p684 = scmp.lt.s32.totalorder %s28, 1
      %s685 = scalar_select %p684, %s28, 1
      %s686 = scalar_lea.vmem %s8, %s685
      %p687 = scmp.lt.s32.totalorder %s28, 1
      %s688 = scalar_select %p687, %s28, 1
      %s689 = scalar_lea.vmem %s9, %s688
      %p690 = scmp.lt.s32.totalorder %s28, 1
      %s691 = scalar_select %p690, %s28, 1
      %s692 = smul.addr %s691, 4
      %s693 = smul.addr %s692, 4
      %s694 = scalar_lea.vmem %s10, %s693
      %p695 = scmp.lt.s32.totalorder %s28, 1
      %s696 = scalar_select %p695, %s28, 1
      %s697 = scalar_lea.vmem %s11, %s696
      %p698 = scmp.lt.s32.totalorder %s28, 1
      %s699 = scalar_select %p698, %s28, 1
      %s700 = smul.addr %s699, 16
      %s701 = smul.addr %s700, 4
      %s702 = scalar_lea.vmem %s12, %s701
      %p703 = scmp.lt.s32.totalorder %s28, 1
      %s704 = scalar_select %p703, %s28, 1
      %s705 = scalar_lea.vmem %s13, %s704
      %p707 = scmp.eq.s32.totalorder %s28, 0
      // Predicated region
      $region89: #{reward_model_forward.1} parent=87 // pred_check
        %p708 = pneg %p707
      $region90: #{reward_model_forward.1} parent=87 // pred_check_branch
        %710 = sbr.rel (%p708) target = $region92
      $region91: #{reward_model_forward.1} parent=87 // pred_region
        %v711 = vld [vmem:[%s0] sm:$0xff]
        %v712 = vld [vmem:[%s0 + $0x8] sm:$0xff]
        %vm713 = vcmask 261120
        %714 = vst.msk [vmem:[#allocation2] sm:$0xff] %vm713, %v711
        %715 = vst.msk [vmem:[#allocation2 + $0x8] sm:$0xff] %vm713, %v712
      $region92: #{reward_model_forward.1} parent=87 // pred_fallthru
        _
      %v716 = vld [vmem:[#allocation2] sm:$0xff]
      %v717 = vld [vmem:[#allocation2 + $0x8] sm:$0xff]
      %v718 = vld [vmem:[%s664] sm:$0x1]
      %v719 = vld [vmem:[%s667] sm:$0x1]
      %vm720 = vcmask 261120
      %v721 = vsel %vm720, %v716, 0.0
      %722 = vadd.xlane.f32.xlu0 %v721
      %v723 = vpop.xlane.xlu0 %722
      %v724 = vsel %vm720, %v717, 0.0
      %725 = vadd.xlane.f32.xlu0 %v724
      %v726 = vpop.xlane.xlu0 %725
      %v727 = vrcp.pop 32.0
      %v728 = vmul.f32 %v723, %v727
      %v729 = vmul.f32 %v726, %v727
      %v730 = vsub.f32 %v716, %v728
      %v731 = vsub.f32 %v717, %v729
      %v732 = vmul.f32 %v730, %v730
      %v733 = vmul.f32 %v731, %v731
      %v734 = vsel %vm720, %v732, 0.0
      %735 = vadd.xlane.f32.xlu0 %v734
      %v736 = vpop.xlane.xlu0 %735
      %v737 = vsel %vm720, %v733, 0.0
      %738 = vadd.xlane.f32.xlu0 %v737
      %v739 = vpop.xlane.xlu0 %738
      %v740 = vmul.f32 %v736, %v727
      %v741 = vmul.f32 %v739, %v727
      %v742 = vadd.f32 %v740, 1e-05
      %v743 = vadd.f32 %v741, 1e-05
      %v744 = vrsqrt.pop %v742
      %v745 = vrsqrt.pop %v743
      %v746 = vmul.f32 %v730, %v744
      %v747 = vmul.f32 %v731, %v745
      %v749 = vlaneseq
      %v750 = vshrl.u32 %v749, 7
      %v751 = vsub.s32 0, %v750
      %v752 = vrot.slane %v718, %v751
      %v754 = vmul.f32 %v746, %v752
      %v755 = vmul.f32 %v747, %v752
      %v757 = vlaneseq
      %v758 = vshrl.u32 %v757, 7
      %v759 = vsub.s32 0, %v758
      %v760 = vrot.slane %v719, %v759
      %v762 = vadd.f32 %v754, %v760
      %v763 = vadd.f32 %v755, %v760
      %v764 = vpack.c.bf16 %v763, %v762
      %v765 = vld [vmem:[%s672] sm:$0xf]
      %v766 = vld [vmem:[%s672 + $0x4] sm:$0xf]
      %v767 = vld [vmem:[%s672 + $0x8] sm:$0xf]
      %v768 = vld [vmem:[%s672 + $0xc] sm:$0xf]
      %v769 = vld [vmem:[%s675] sm:$0x1]
      %v771 = vlaneseq
      %v772 = vshrl.u32 %v771, 7
      %v773 = vsub.s32 0, %v772
      %v774 = vrot.slane %v769, %v773
      %v780 = vunpack.c.l.b16 %v765
      %v781 = vunpack.c.l.b16 %v766
      %v782 = vunpack.c.l.b16 %v767
      %v783 = vunpack.c.l.b16 %v768
      %v784 = vpack.c.b16 %v781, %v780
      %v785 = vpack.c.b16 %v783, %v782
      %v789 = vsel %vm720, %v764, 0
      %791 = vmatprep.subr.bf16.mxu0 0
      %792 = vmatpush1.bf16.msra.mxu0 0
      %793 = vmatprep.subr.bf16.mxu0 0
      %794 = vmatpush1.bf16.msra.mxu0 0
      %795 = vmatprep.subr.bf16.mxu0 0
      %796 = vmatpush1.bf16.msra.mxu0 0
      %797 = vmatprep.subr.bf16.mxu0 0
      %798 = vmatpush1.bf16.msra.mxu0 0
      %799 = vmatprep.subr.bf16.mxu0 0
      %800 = vmatpush1.bf16.msra.mxu0 0
      %801 = vmatprep.subr.bf16.mxu0 0
      %802 = vmatpush1.bf16.msra.mxu0 0
      %803 = vmatprep.subr.bf16.mxu0 0
      %804 = vmatpush1.bf16.msra.mxu0 %v785
      %805 = vmatprep.subr.bf16.mxu0 0
      %806 = vmatpush1.bf16.msra.mxu0 %v784
      %807 = vmatprep.subr.bf16.mxu0 0
      %808 = vmatpush2.bf16.msra.mxu0 0
      %809 = vmatprep.subr.bf16.mxu0 0
      %810 = vmatpush2.bf16.msra.mxu0 0
      %811 = vmatprep.subr.bf16.mxu0 0
      %812 = vmatpush2.bf16.msra.mxu0 0
      %813 = vmatprep.subr.bf16.mxu0 0
      %814 = vmatpush2.bf16.msra.mxu0 0
      %815 = vmatprep.subr.bf16.mxu0 0
      %816 = vmatpush2.bf16.msra.mxu0 0
      %817 = vmatprep.subr.bf16.mxu0 0
      %818 = vmatpush2.bf16.msra.mxu0 0
      %819 = vmatprep.subr.bf16.mxu0 0
      %820 = vmatpush2.bf16.msra.mxu0 0
      %821 = vmatprep.subr.bf16.mxu0 0
      %822 = vmatpush2.bf16.msra.mxu0 0
      %823 = vmatprep.mubr.bf16.mxu0 0
      %824 = vmatmul.mubr.bf16.gmra.mxu0 %v789
      %v825 = vpop.f32.mrf.mxu0
      %v826 = vadd.f32 %v774, %v825
      %v827 = vpop.f32.mrf.mxu0
      %v828 = vpop.f32.mrf.mxu0
      %v829 = vadd.f32 %v774, %v828
      %v830 = vpop.f32.mrf.mxu0
      %831 = vdwg.mxu0
      %v832 = vld [vmem:[%s1] sm:$0xff]
      %v833 = vpack.c.bf16 %v826, %v826
      %835 = vrot.lane.b32.xlu0 %v833, 96
      %v836 = vpop.permute.xlu0 %835
      %vm837 = vcmask 130048
      %v839 = vsel %vm837, %v833, 0
      %v842 = vsel %vm837, %v836, 0
      %844 = vmatprep.subr.bf16.mxu0 0
      %845 = vmatpush1.bf16.xpose.msra.mxu0 0
      %846 = vmatprep.subr.bf16.mxu0 0
      %847 = vmatpush1.bf16.xpose.msra.mxu0 0
      %848 = vmatprep.subr.bf16.mxu0 0
      %849 = vmatpush1.bf16.xpose.msra.mxu0 0
      %850 = vmatprep.subr.bf16.mxu0 0
      %851 = vmatpush1.bf16.xpose.msra.mxu0 0
      %852 = vmatprep.subr.bf16.mxu0 0
      %853 = vmatpush1.bf16.xpose.msra.mxu0 0
      %854 = vmatprep.subr.bf16.mxu0 0
      %855 = vmatpush1.bf16.xpose.msra.mxu0 0
      %856 = vmatprep.subr.bf16.mxu0 0
      %857 = vmatpush1.bf16.xpose.msra.mxu0 0
      %858 = vmatprep.subr.bf16.mxu0 0
      %859 = vmatpush1.bf16.xpose.msra.mxu0 %v842
      %860 = vmatprep.subr.bf16.mxu0 0
      %861 = vmatpush2.bf16.xpose.msra.mxu0 0
      %862 = vmatprep.subr.bf16.mxu0 0
      %863 = vmatpush2.bf16.xpose.msra.mxu0 0
      %864 = vmatprep.subr.bf16.mxu0 0
      %865 = vmatpush2.bf16.xpose.msra.mxu0 0
      %866 = vmatprep.subr.bf16.mxu0 0
      %867 = vmatpush2.bf16.xpose.msra.mxu0 0
      %868 = vmatprep.subr.bf16.mxu0 0
      %869 = vmatpush2.bf16.xpose.msra.mxu0 0
      %870 = vmatprep.subr.bf16.mxu0 0
      %871 = vmatpush2.bf16.xpose.msra.mxu0 0
      %872 = vmatprep.subr.bf16.mxu0 0
      %873 = vmatpush2.bf16.xpose.msra.mxu0 0
      %874 = vmatprep.subr.bf16.mxu0 0
      %875 = vmatpush2.bf16.xpose.msra.mxu0 0
      %876 = vmatprep.mubr.bf16.mxu0 0
      %877 = vmatmul.mubr.bf16.gmra.mxu0 %v839
      %v878 = vpop.f32.mrf.mxu0
      %v879 = vadd.f32 %v832, %v878
      %v880 = vpop.f32.mrf.mxu0
      %v881 = vpop.f32.mrf.mxu0
      %v882 = vpop.f32.mrf.mxu0
      %883 = vdwg.mxu0
      %vm884 = vcmask 64512
      %v885 = vsel %vm884, %v879, -inf
      %886 = vmax.xlane.f32.xlu0 %v885
      %v887 = vpop.xlane.xlu0 %886
      %v888 = vsub.f32 %v879, %v887
      %v889 = vmul.f32 %v888, 1.442695
      %v890 = vpow.pop %v889
      %v891 = vsel %vm884, %v890, 0.0
      %892 = vadd.xlane.f32.xlu0 %v891
      %v893 = vpop.xlane.xlu0 %892
      %v894 = vrcp.pop %v893
      %v895 = vmul.f32 %v890, %v894
      %v896 = vpack.c.bf16 %v895, %v895
      %897 = vrot.lane.b32.xlu0 %v833, 64
      %v898 = vpop.permute.xlu0 %897
      %v900 = vsel %vm884, %v896, 0
      %vm902 = vcmask 1043456
      %v904 = vsel %vm902, %v898, 0
      %906 = vmatprep.subr.bf16.mxu0 0
      %907 = vmatpush1.bf16.msra.mxu0 0
      %908 = vmatprep.subr.bf16.mxu0 0
      %909 = vmatpush1.bf16.msra.mxu0 0
      %910 = vmatprep.subr.bf16.mxu0 0
      %911 = vmatpush1.bf16.msra.mxu0 0
      %912 = vmatprep.subr.bf16.mxu0 0
      %913 = vmatpush1.bf16.msra.mxu0 0
      %914 = vmatprep.subr.bf16.mxu0 0
      %915 = vmatpush1.bf16.msra.mxu0 0
      %916 = vmatprep.subr.bf16.mxu0 0
      %917 = vmatpush1.bf16.msra.mxu0 0
      %918 = vmatprep.subr.bf16.mxu0 0
      %919 = vmatpush1.bf16.msra.mxu0 0
      %920 = vmatprep.subr.bf16.mxu0 0
      %921 = vmatpush1.bf16.msra.mxu0 %v904
      %922 = vmatprep.subr.bf16.mxu0 0
      %923 = vmatpush2.bf16.msra.mxu0 0
      %924 = vmatprep.subr.bf16.mxu0 0
      %925 = vmatpush2.bf16.msra.mxu0 0
      %926 = vmatprep.subr.bf16.mxu0 0
      %927 = vmatpush2.bf16.msra.mxu0 0
      %928 = vmatprep.subr.bf16.mxu0 0
      %929 = vmatpush2.bf16.msra.mxu0 0
      %930 = vmatprep.subr.bf16.mxu0 0
      %931 = vmatpush2.bf16.msra.mxu0 0
      %932 = vmatprep.subr.bf16.mxu0 0
      %933 = vmatpush2.bf16.msra.mxu0 0
      %934 = vmatprep.subr.bf16.mxu0 0
      %935 = vmatpush2.bf16.msra.mxu0 0
      %936 = vmatprep.subr.bf16.mxu0 0
      %937 = vmatpush2.bf16.msra.mxu0 0
      %938 = vmatprep.mubr.bf16.mxu0 0
      %939 = vmatmul.mubr.bf16.gmra.mxu0 %v900
      %v940 = vpop.f32.mrf.mxu0
      %v941 = vadd.f32 0.0, %v940
      %v942 = vpop.f32.mrf.mxu0
      %v943 = vpop.f32.mrf.mxu0
      %v944 = vpop.f32.mrf.mxu0
      %945 = vdwg.mxu0
      %946 = vrot.lane.b32.xlu0 %v833, 112
      %v947 = vpop.permute.xlu0 %946
      %948 = vrot.lane.b32.xlu0 %v833, 80
      %v949 = vpop.permute.xlu0 %948
      %v951 = vsel %vm837, %v947, 0
      %v954 = vsel %vm837, %v949, 0
      %956 = vmatprep.subr.bf16.mxu0 0
      %957 = vmatpush1.bf16.xpose.msra.mxu0 0
      %958 = vmatprep.subr.bf16.mxu0 0
      %959 = vmatpush1.bf16.xpose.msra.mxu0 0
      %960 = vmatprep.subr.bf16.mxu0 0
      %961 = vmatpush1.bf16.xpose.msra.mxu0 0
      %962 = vmatprep.subr.bf16.mxu0 0
      %963 = vmatpush1.bf16.xpose.msra.mxu0 0
      %964 = vmatprep.subr.bf16.mxu0 0
      %965 = vmatpush1.bf16.xpose.msra.mxu0 0
      %966 = vmatprep.subr.bf16.mxu0 0
      %967 = vmatpush1.bf16.xpose.msra.mxu0 0
      %968 = vmatprep.subr.bf16.mxu0 0
      %969 = vmatpush1.bf16.xpose.msra.mxu0 0
      %970 = vmatprep.subr.bf16.mxu0 0
      %971 = vmatpush1.bf16.xpose.msra.mxu0 %v954
      %972 = vmatprep.subr.bf16.mxu0 0
      %973 = vmatpush2.bf16.xpose.msra.mxu0 0
      %974 = vmatprep.subr.bf16.mxu0 0
      %975 = vmatpush2.bf16.xpose.msra.mxu0 0
      %976 = vmatprep.subr.bf16.mxu0 0
      %977 = vmatpush2.bf16.xpose.msra.mxu0 0
      %978 = vmatprep.subr.bf16.mxu0 0
      %979 = vmatpush2.bf16.xpose.msra.mxu0 0
      %980 = vmatprep.subr.bf16.mxu0 0
      %981 = vmatpush2.bf16.xpose.msra.mxu0 0
      %982 = vmatprep.subr.bf16.mxu0 0
      %983 = vmatpush2.bf16.xpose.msra.mxu0 0
      %984 = vmatprep.subr.bf16.mxu0 0
      %985 = vmatpush2.bf16.xpose.msra.mxu0 0
      %986 = vmatprep.subr.bf16.mxu0 0
      %987 = vmatpush2.bf16.xpose.msra.mxu0 0
      %988 = vmatprep.mubr.bf16.mxu0 0
      %989 = vmatmul.mubr.bf16.gmra.mxu0 %v951
      %v990 = vpop.f32.mrf.mxu0
      %v991 = vadd.f32 %v832, %v990
      %v992 = vpop.f32.mrf.mxu0
      %v993 = vpop.f32.mrf.mxu0
      %v994 = vpop.f32.mrf.mxu0
      %995 = vdwg.mxu0
      %v996 = vsel %vm884, %v991, -inf
      %997 = vmax.xlane.f32.xlu0 %v996
      %v998 = vpop.xlane.xlu0 %997
      %v999 = vsub.f32 %v991, %v998
      %v1000 = vmul.f32 %v999, 1.442695
      %v1001 = vpow.pop %v1000
      %v1002 = vsel %vm884, %v1001, 0.0
      %1003 = vadd.xlane.f32.xlu0 %v1002
      %v1004 = vpop.xlane.xlu0 %1003
      %v1005 = vrcp.pop %v1004
      %v1006 = vmul.f32 %v1001, %v1005
      %v1007 = vpack.c.bf16 %v1006, %v1006
      %1008 = vrot.lane.b32.xlu0 %v833, 48
      %v1009 = vpop.permute.xlu0 %1008
      %v1011 = vsel %vm884, %v1007, 0
      %v1014 = vsel %vm902, %v1009, 0
      %1016 = vmatprep.subr.bf16.mxu0 0
      %1017 = vmatpush1.bf16.msra.mxu0 0
      %1018 = vmatprep.subr.bf16.mxu0 0
      %1019 = vmatpush1.bf16.msra.mxu0 0
      %1020 = vmatprep.subr.bf16.mxu0 0
      %1021 = vmatpush1.bf16.msra.mxu0 0
      %1022 = vmatprep.subr.bf16.mxu0 0
      %1023 = vmatpush1.bf16.msra.mxu0 0
      %1024 = vmatprep.subr.bf16.mxu0 0
      %1025 = vmatpush1.bf16.msra.mxu0 0
      %1026 = vmatprep.subr.bf16.mxu0 0
      %1027 = vmatpush1.bf16.msra.mxu0 0
      %1028 = vmatprep.subr.bf16.mxu0 0
      %1029 = vmatpush1.bf16.msra.mxu0 0
      %1030 = vmatprep.subr.bf16.mxu0 0
      %1031 = vmatpush1.bf16.msra.mxu0 %v1014
      %1032 = vmatprep.subr.bf16.mxu0 0
      %1033 = vmatpush2.bf16.msra.mxu0 0
      %1034 = vmatprep.subr.bf16.mxu0 0
      %1035 = vmatpush2.bf16.msra.mxu0 0
      %1036 = vmatprep.subr.bf16.mxu0 0
      %1037 = vmatpush2.bf16.msra.mxu0 0
      %1038 = vmatprep.subr.bf16.mxu0 0
      %1039 = vmatpush2.bf16.msra.mxu0 0
      %1040 = vmatprep.subr.bf16.mxu0 0
      %1041 = vmatpush2.bf16.msra.mxu0 0
      %1042 = vmatprep.subr.bf16.mxu0 0
      %1043 = vmatpush2.bf16.msra.mxu0 0
      %1044 = vmatprep.subr.bf16.mxu0 0
      %1045 = vmatpush2.bf16.msra.mxu0 0
      %1046 = vmatprep.subr.bf16.mxu0 0
      %1047 = vmatpush2.bf16.msra.mxu0 0
      %1048 = vmatprep.mubr.bf16.mxu0 0
      %1049 = vmatmul.mubr.bf16.gmra.mxu0 %v1011
      %v1050 = vpop.f32.mrf.mxu0
      %v1051 = vadd.f32 0.0, %v1050
      %v1052 = vpop.f32.mrf.mxu0
      %v1053 = vpop.f32.mrf.mxu0
      %v1054 = vpop.f32.mrf.mxu0
      %1055 = vdwg.mxu0
      %1057 = vrot.lane.b32.xlu0 %v1051, 16
      %v1058 = vpop.permute.xlu0 %1057
      %v1060 = vsel %vm837, %v941, %v1058
      %s1061 = scalar_lea.vmem %s1, 8
      %v1062 = vld [vmem:[%s1061] sm:$0xff]
      %v1063 = vpack.c.bf16 %v829, %v829
      %1065 = vrot.lane.b32.xlu0 %v1063, 96
      %v1066 = vpop.permute.xlu0 %1065
      %v1068 = vsel %vm837, %v1063, 0
      %v1071 = vsel %vm837, %v1066, 0
      %1073 = vmatprep.subr.bf16.mxu0 0
      %1074 = vmatpush1.bf16.xpose.msra.mxu0 0
      %1075 = vmatprep.subr.bf16.mxu0 0
      %1076 = vmatpush1.bf16.xpose.msra.mxu0 0
      %1077 = vmatprep.subr.bf16.mxu0 0
      %1078 = vmatpush1.bf16.xpose.msra.mxu0 0
      %1079 = vmatprep.subr.bf16.mxu0 0
      %1080 = vmatpush1.bf16.xpose.msra.mxu0 0
      %1081 = vmatprep.subr.bf16.mxu0 0
      %1082 = vmatpush1.bf16.xpose.msra.mxu0 0
      %1083 = vmatprep.subr.bf16.mxu0 0
      %1084 = vmatpush1.bf16.xpose.msra.mxu0 0
      %1085 = vmatprep.subr.bf16.mxu0 0
      %1086 = vmatpush1.bf16.xpose.msra.mxu0 0
      %1087 = vmatprep.subr.bf16.mxu0 0
      %1088 = vmatpush1.bf16.xpose.msra.mxu0 %v1071
      %1089 = vmatprep.subr.bf16.mxu0 0
      %1090 = vmatpush2.bf16.xpose.msra.mxu0 0
      %1091 = vmatprep.subr.bf16.mxu0 0
      %1092 = vmatpush2.bf16.xpose.msra.mxu0 0
      %1093 = vmatprep.subr.bf16.mxu0 0
      %1094 = vmatpush2.bf16.xpose.msra.mxu0 0
      %1095 = vmatprep.subr.bf16.mxu0 0
      %1096 = vmatpush2.bf16.xpose.msra.mxu0 0
      %1097 = vmatprep.subr.bf16.mxu0 0
      %1098 = vmatpush2.bf16.xpose.msra.mxu0 0
      %1099 = vmatprep.subr.bf16.mxu0 0
      %1100 = vmatpush2.bf16.xpose.msra.mxu0 0
      %1101 = vmatprep.subr.bf16.mxu0 0
      %1102 = vmatpush2.bf16.xpose.msra.mxu0 0
      %1103 = vmatprep.subr.bf16.mxu0 0
      %1104 = vmatpush2.bf16.xpose.msra.mxu0 0
      %1105 = vmatprep.mubr.bf16.mxu0 0
      %1106 = vmatmul.mubr.bf16.gmra.mxu0 %v1068
      %v1107 = vpop.f32.mrf.mxu0
      %v1108 = vadd.f32 %v1062, %v1107
      %v1109 = vpop.f32.mrf.mxu0
      %v1110 = vpop.f32.mrf.mxu0
      %v1111 = vpop.f32.mrf.mxu0
      %1112 = vdwg.mxu0
      %v1113 = vsel %vm884, %v1108, -inf
      %1114 = vmax.xlane.f32.xlu0 %v1113
      %v1115 = vpop.xlane.xlu0 %1114
      %v1116 = vsub.f32 %v1108, %v1115
      %v1117 = vmul.f32 %v1116, 1.442695
      %v1118 = vpow.pop %v1117
      %v1119 = vsel %vm884, %v1118, 0.0
      %1120 = vadd.xlane.f32.xlu0 %v1119
      %v1121 = vpop.xlane.xlu0 %1120
      %v1122 = vrcp.pop %v1121
      %v1123 = vmul.f32 %v1118, %v1122
      %v1124 = vpack.c.bf16 %v1123, %v1123
      %1125 = vrot.lane.b32.xlu0 %v1063, 64
      %v1126 = vpop.permute.xlu0 %1125
      %v1128 = vsel %vm884, %v1124, 0
      %v1131 = vsel %vm902, %v1126, 0
      %1133 = vmatprep.subr.bf16.mxu0 0
      %1134 = vmatpush1.bf16.msra.mxu0 0
      %1135 = vmatprep.subr.bf16.mxu0 0
      %1136 = vmatpush1.bf16.msra.mxu0 0
      %1137 = vmatprep.subr.bf16.mxu0 0
      %1138 = vmatpush1.bf16.msra.mxu0 0
      %1139 = vmatprep.subr.bf16.mxu0 0
      %1140 = vmatpush1.bf16.msra.mxu0 0
      %1141 = vmatprep.subr.bf16.mxu0 0
      %1142 = vmatpush1.bf16.msra.mxu0 0
      %1143 = vmatprep.subr.bf16.mxu0 0
      %1144 = vmatpush1.bf16.msra.mxu0 0
      %1145 = vmatprep.subr.bf16.mxu0 0
      %1146 = vmatpush1.bf16.msra.mxu0 0
      %1147 = vmatprep.subr.bf16.mxu0 0
      %1148 = vmatpush1.bf16.msra.mxu0 %v1131
      %1149 = vmatprep.subr.bf16.mxu0 0
      %1150 = vmatpush2.bf16.msra.mxu0 0
      %1151 = vmatprep.subr.bf16.mxu0 0
      %1152 = vmatpush2.bf16.msra.mxu0 0
      %1153 = vmatprep.subr.bf16.mxu0 0
      %1154 = vmatpush2.bf16.msra.mxu0 0
      %1155 = vmatprep.subr.bf16.mxu0 0
      %1156 = vmatpush2.bf16.msra.mxu0 0
      %1157 = vmatprep.subr.bf16.mxu0 0
      %1158 = vmatpush2.bf16.msra.mxu0 0
      %1159 = vmatprep.subr.bf16.mxu0 0
      %1160 = vmatpush2.bf16.msra.mxu0 0
      %1161 = vmatprep.subr.bf16.mxu0 0
      %1162 = vmatpush2.bf16.msra.mxu0 0
      %1163 = vmatprep.subr.bf16.mxu0 0
      %1164 = vmatpush2.bf16.msra.mxu0 0
      %1165 = vmatprep.mubr.bf16.mxu0 0
      %1166 = vmatmul.mubr.bf16.gmra.mxu0 %v1128
      %v1167 = vpop.f32.mrf.mxu0
      %v1168 = vadd.f32 0.0, %v1167
      %v1169 = vpop.f32.mrf.mxu0
      %v1170 = vpop.f32.mrf.mxu0
      %v1171 = vpop.f32.mrf.mxu0
      %1172 = vdwg.mxu0
      %1173 = vrot.lane.b32.xlu0 %v1063, 112
      %v1174 = vpop.permute.xlu0 %1173
      %1175 = vrot.lane.b32.xlu0 %v1063, 80
      %v1176 = vpop.permute.xlu0 %1175
      %v1178 = vsel %vm837, %v1174, 0
      %v1181 = vsel %vm837, %v1176, 0
      %1183 = vmatprep.subr.bf16.mxu0 0
      %1184 = vmatpush1.bf16.xpose.msra.mxu0 0
      %1185 = vmatprep.subr.bf16.mxu0 0
      %1186 = vmatpush1.bf16.xpose.msra.mxu0 0
      %1187 = vmatprep.subr.bf16.mxu0 0
      %1188 = vmatpush1.bf16.xpose.msra.mxu0 0
      %1189 = vmatprep.subr.bf16.mxu0 0
      %1190 = vmatpush1.bf16.xpose.msra.mxu0 0
      %1191 = vmatprep.subr.bf16.mxu0 0
      %1192 = vmatpush1.bf16.xpose.msra.mxu0 0
      %1193 = vmatprep.subr.bf16.mxu0 0
      %1194 = vmatpush1.bf16.xpose.msra.mxu0 0
      %1195 = vmatprep.subr.bf16.mxu0 0
      %1196 = vmatpush1.bf16.xpose.msra.mxu0 0
      %1197 = vmatprep.subr.bf16.mxu0 0
      %1198 = vmatpush1.bf16.xpose.msra.mxu0 %v1181
      %1199 = vmatprep.subr.bf16.mxu0 0
      %1200 = vmatpush2.bf16.xpose.msra.mxu0 0
      %1201 = vmatprep.subr.bf16.mxu0 0
      %1202 = vmatpush2.bf16.xpose.msra.mxu0 0
      %1203 = vmatprep.subr.bf16.mxu0 0
      %1204 = vmatpush2.bf16.xpose.msra.mxu0 0
      %1205 = vmatprep.subr.bf16.mxu0 0
      %1206 = vmatpush2.bf16.xpose.msra.mxu0 0
      %1207 = vmatprep.subr.bf16.mxu0 0
      %1208 = vmatpush2.bf16.xpose.msra.mxu0 0
      %1209 = vmatprep.subr.bf16.mxu0 0
      %1210 = vmatpush2.bf16.xpose.msra.mxu0 0
      %1211 = vmatprep.subr.bf16.mxu0 0
      %1212 = vmatpush2.bf16.xpose.msra.mxu0 0
      %1213 = vmatprep.subr.bf16.mxu0 0
      %1214 = vmatpush2.bf16.xpose.msra.mxu0 0
      %1215 = vmatprep.mubr.bf16.mxu0 0
      %1216 = vmatmul.mubr.bf16.gmra.mxu0 %v1178
      %v1217 = vpop.f32.mrf.mxu0
      %v1218 = vadd.f32 %v1062, %v1217
      %v1219 = vpop.f32.mrf.mxu0
      %v1220 = vpop.f32.mrf.mxu0
      %v1221 = vpop.f32.mrf.mxu0
      %1222 = vdwg.mxu0
      %v1223 = vsel %vm884, %v1218, -inf
      %1224 = vmax.xlane.f32.xlu0 %v1223
      %v1225 = vpop.xlane.xlu0 %1224
      %v1226 = vsub.f32 %v1218, %v1225
      %v1227 = vmul.f32 %v1226, 1.442695
      %v1228 = vpow.pop %v1227
      %v1229 = vsel %vm884, %v1228, 0.0
      %1230 = vadd.xlane.f32.xlu0 %v1229
      %v1231 = vpop.xlane.xlu0 %1230
      %v1232 = vrcp.pop %v1231
      %v1233 = vmul.f32 %v1228, %v1232
      %v1234 = vpack.c.bf16 %v1233, %v1233
      %1235 = vrot.lane.b32.xlu0 %v1063, 48
      %v1236 = vpop.permute.xlu0 %1235
      %v1238 = vsel %vm884, %v1234, 0
      %v1241 = vsel %vm902, %v1236, 0
      %1243 = vmatprep.subr.bf16.mxu0 0
      %1244 = vmatpush1.bf16.msra.mxu0 0
      %1245 = vmatprep.subr.bf16.mxu0 0
      %1246 = vmatpush1.bf16.msra.mxu0 0
      %1247 = vmatprep.subr.bf16.mxu0 0
      %1248 = vmatpush1.bf16.msra.mxu0 0
      %1249 = vmatprep.subr.bf16.mxu0 0
      %1250 = vmatpush1.bf16.msra.mxu0 0
      %1251 = vmatprep.subr.bf16.mxu0 0
      %1252 = vmatpush1.bf16.msra.mxu0 0
      %1253 = vmatprep.subr.bf16.mxu0 0
      %1254 = vmatpush1.bf16.msra.mxu0 0
      %1255 = vmatprep.subr.bf16.mxu0 0
      %1256 = vmatpush1.bf16.msra.mxu0 0
      %1257 = vmatprep.subr.bf16.mxu0 0
      %1258 = vmatpush1.bf16.msra.mxu0 %v1241
      %1259 = vmatprep.subr.bf16.mxu0 0
      %1260 = vmatpush2.bf16.msra.mxu0 0
      %1261 = vmatprep.subr.bf16.mxu0 0
      %1262 = vmatpush2.bf16.msra.mxu0 0
      %1263 = vmatprep.subr.bf16.mxu0 0
      %1264 = vmatpush2.bf16.msra.mxu0 0
      %1265 = vmatprep.subr.bf16.mxu0 0
      %1266 = vmatpush2.bf16.msra.mxu0 0
      %1267 = vmatprep.subr.bf16.mxu0 0
      %1268 = vmatpush2.bf16.msra.mxu0 0
      %1269 = vmatprep.subr.bf16.mxu0 0
      %1270 = vmatpush2.bf16.msra.mxu0 0
      %1271 = vmatprep.subr.bf16.mxu0 0
      %1272 = vmatpush2.bf16.msra.mxu0 0
      %1273 = vmatprep.subr.bf16.mxu0 0
      %1274 = vmatpush2.bf16.msra.mxu0 0
      %1275 = vmatprep.mubr.bf16.mxu0 0
      %1276 = vmatmul.mubr.bf16.gmra.mxu0 %v1238
      %v1277 = vpop.f32.mrf.mxu0
      %v1278 = vadd.f32 0.0, %v1277
      %v1279 = vpop.f32.mrf.mxu0
      %v1280 = vpop.f32.mrf.mxu0
      %v1281 = vpop.f32.mrf.mxu0
      %1282 = vdwg.mxu0
      %1284 = vrot.lane.b32.xlu0 %v1278, 16
      %v1285 = vpop.permute.xlu0 %1284
      %v1287 = vsel %vm837, %v1168, %v1285
      %v1288 = vpack.c.bf16 %v1287, %v1060
      %v1289 = vld [vmem:[%s680] sm:$0xf]
      %v1290 = vld [vmem:[%s680 + $0x4] sm:$0xf]
      %v1291 = vld [vmem:[%s680 + $0x8] sm:$0xf]
      %v1292 = vld [vmem:[%s680 + $0xc] sm:$0xf]
      %v1293 = vld [vmem:[%s683] sm:$0x1]
      %v1295 = vlaneseq
      %v1296 = vshrl.u32 %v1295, 7
      %v1297 = vsub.s32 0, %v1296
      %v1298 = vrot.slane %v1293, %v1297
      %v1304 = vunpack.c.l.b16 %v1289
      %v1305 = vunpack.c.l.b16 %v1290
      %v1306 = vunpack.c.l.b16 %v1291
      %v1307 = vunpack.c.l.b16 %v1292
      %v1308 = vpack.c.b16 %v1305, %v1304
      %v1309 = vpack.c.b16 %v1307, %v1306
      %v1313 = vsel %vm720, %v1288, 0
      %1315 = vmatprep.subr.bf16.mxu0 0
      %1316 = vmatpush1.bf16.msra.mxu0 0
      %1317 = vmatprep.subr.bf16.mxu0 0
      %1318 = vmatpush1.bf16.msra.mxu0 0
      %1319 = vmatprep.subr.bf16.mxu0 0
      %1320 = vmatpush1.bf16.msra.mxu0 0
      %1321 = vmatprep.subr.bf16.mxu0 0
      %1322 = vmatpush1.bf16.msra.mxu0 0
      %1323 = vmatprep.subr.bf16.mxu0 0
      %1324 = vmatpush1.bf16.msra.mxu0 0
      %1325 = vmatprep.subr.bf16.mxu0 0
      %1326 = vmatpush1.bf16.msra.mxu0 0
      %1327 = vmatprep.subr.bf16.mxu0 0
      %1328 = vmatpush1.bf16.msra.mxu0 %v1309
      %1329 = vmatprep.subr.bf16.mxu0 0
      %1330 = vmatpush1.bf16.msra.mxu0 %v1308
      %1331 = vmatprep.subr.bf16.mxu0 0
      %1332 = vmatpush2.bf16.msra.mxu0 0
      %1333 = vmatprep.subr.bf16.mxu0 0
      %1334 = vmatpush2.bf16.msra.mxu0 0
      %1335 = vmatprep.subr.bf16.mxu0 0
      %1336 = vmatpush2.bf16.msra.mxu0 0
      %1337 = vmatprep.subr.bf16.mxu0 0
      %1338 = vmatpush2.bf16.msra.mxu0 0
      %1339 = vmatprep.subr.bf16.mxu0 0
      %1340 = vmatpush2.bf16.msra.mxu0 0
      %1341 = vmatprep.subr.bf16.mxu0 0
      %1342 = vmatpush2.bf16.msra.mxu0 0
      %1343 = vmatprep.subr.bf16.mxu0 0
      %1344 = vmatpush2.bf16.msra.mxu0 0
      %1345 = vmatprep.subr.bf16.mxu0 0
      %1346 = vmatpush2.bf16.msra.mxu0 0
      %1347 = vmatprep.mubr.bf16.mxu0 0
      %1348 = vmatmul.mubr.bf16.gmra.mxu0 %v1313
      %v1349 = vpop.f32.mrf.mxu0
      %v1350 = vadd.f32 %v1298, %v1349
      %v1351 = vpop.f32.mrf.mxu0
      %v1352 = vpop.f32.mrf.mxu0
      %v1353 = vadd.f32 %v1298, %v1352
      %v1354 = vpop.f32.mrf.mxu0
      %1355 = vdwg.mxu0
      %v1356 = vadd.f32 %v716, %v1350
      %v1357 = vadd.f32 %v717, %v1353
      %v1358 = vld [vmem:[%s686] sm:$0x1]
      %v1359 = vld [vmem:[%s689] sm:$0x1]
      %v1360 = vsel %vm720, %v1356, 0.0
      %1361 = vadd.xlane.f32.xlu0 %v1360
      %v1362 = vpop.xlane.xlu0 %1361
      %v1363 = vsel %vm720, %v1357, 0.0
      %1364 = vadd.xlane.f32.xlu0 %v1363
      %v1365 = vpop.xlane.xlu0 %1364
      %v1366 = vmul.f32 %v1362, %v727
      %v1367 = vmul.f32 %v1365, %v727
      %v1368 = vsub.f32 %v1356, %v1366
      %v1369 = vsub.f32 %v1357, %v1367
      %v1370 = vmul.f32 %v1368, %v1368
      %v1371 = vmul.f32 %v1369, %v1369
      %v1372 = vsel %vm720, %v1370, 0.0
      %1373 = vadd.xlane.f32.xlu0 %v1372
      %v1374 = vpop.xlane.xlu0 %1373
      %v1375 = vsel %vm720, %v1371, 0.0
      %1376 = vadd.xlane.f32.xlu0 %v1375
      %v1377 = vpop.xlane.xlu0 %1376
      %v1378 = vmul.f32 %v1374, %v727
      %v1379 = vmul.f32 %v1377, %v727
      %v1380 = vadd.f32 %v1378, 1e-05
      %v1381 = vadd.f32 %v1379, 1e-05
      %v1382 = vrsqrt.pop %v1380
      %v1383 = vrsqrt.pop %v1381
      %v1384 = vmul.f32 %v1368, %v1382
      %v1385 = vmul.f32 %v1369, %v1383
      %v1387 = vlaneseq
      %v1388 = vshrl.u32 %v1387, 7
      %v1389 = vsub.s32 0, %v1388
      %v1390 = vrot.slane %v1358, %v1389
      %v1392 = vmul.f32 %v1384, %v1390
      %v1393 = vmul.f32 %v1385, %v1390
      %v1395 = vlaneseq
      %v1396 = vshrl.u32 %v1395, 7
      %v1397 = vsub.s32 0, %v1396
      %v1398 = vrot.slane %v1359, %v1397
      %v1400 = vadd.f32 %v1392, %v1398
      %v1401 = vadd.f32 %v1393, %v1398
      %v1402 = vpack.c.bf16 %v1401, %v1400
      %v1403 = vld [vmem:[%s694] sm:$0xf]
      %v1404 = vld [vmem:[%s694 + $0x4] sm:$0xf]
      %v1405 = vld [vmem:[%s694 + $0x8] sm:$0xf]
      %v1406 = vld [vmem:[%s694 + $0xc] sm:$0xf]
      %v1407 = vld [vmem:[%s697] sm:$0x1]
      %v1409 = vlaneseq
      %v1410 = vshrl.u32 %v1409, 7
      %v1411 = vsub.s32 0, %v1410
      %v1412 = vrot.slane %v1407, %v1411
      %v1418 = vunpack.c.l.b16 %v1403
      %v1419 = vunpack.c.l.b16 %v1404
      %v1420 = vunpack.c.l.b16 %v1405
      %v1421 = vunpack.c.l.b16 %v1406
      %v1422 = vpack.c.b16 %v1419, %v1418
      %v1423 = vpack.c.b16 %v1421, %v1420
      %v1427 = vsel %vm720, %v1402, 0
      %1429 = vmatprep.subr.bf16.mxu0 0
      %1430 = vmatpush1.bf16.msra.mxu0 0
      %1431 = vmatprep.subr.bf16.mxu0 0
      %1432 = vmatpush1.bf16.msra.mxu0 0
      %1433 = vmatprep.subr.bf16.mxu0 0
      %1434 = vmatpush1.bf16.msra.mxu0 0
      %1435 = vmatprep.subr.bf16.mxu0 0
      %1436 = vmatpush1.bf16.msra.mxu0 0
      %1437 = vmatprep.subr.bf16.mxu0 0
      %1438 = vmatpush1.bf16.msra.mxu0 0
      %1439 = vmatprep.subr.bf16.mxu0 0
      %1440 = vmatpush1.bf16.msra.mxu0 0
      %1441 = vmatprep.subr.bf16.mxu0 0
      %1442 = vmatpush1.bf16.msra.mxu0 %v1423
      %1443 = vmatprep.subr.bf16.mxu0 0
      %1444 = vmatpush1.bf16.msra.mxu0 %v1422
      %1445 = vmatprep.subr.bf16.mxu0 0
      %1446 = vmatpush2.bf16.msra.mxu0 0
      %1447 = vmatprep.subr.bf16.mxu0 0
      %1448 = vmatpush2.bf16.msra.mxu0 0
      %1449 = vmatprep.subr.bf16.mxu0 0
      %1450 = vmatpush2.bf16.msra.mxu0 0
      %1451 = vmatprep.subr.bf16.mxu0 0
      %1452 = vmatpush2.bf16.msra.mxu0 0
      %1453 = vmatprep.subr.bf16.mxu0 0
      %1454 = vmatpush2.bf16.msra.mxu0 0
      %1455 = vmatprep.subr.bf16.mxu0 0
      %1456 = vmatpush2.bf16.msra.mxu0 0
      %1457 = vmatprep.subr.bf16.mxu0 0
      %1458 = vmatpush2.bf16.msra.mxu0 0
      %1459 = vmatprep.subr.bf16.mxu0 0
      %1460 = vmatpush2.bf16.msra.mxu0 0
      %1461 = vmatprep.mubr.bf16.mxu0 0
      %1462 = vmatmul.mubr.bf16.gmra.mxu0 %v1427
      %v1463 = vpop.f32.mrf.mxu0
      %v1464 = vadd.f32 %v1412, %v1463
      %v1465 = vpop.f32.mrf.mxu0
      %v1466 = vpop.f32.mrf.mxu0
      %v1467 = vadd.f32 %v1412, %v1466
      %v1468 = vpop.f32.mrf.mxu0
      %1469 = vdwg.mxu0
      %v1470 = vmul.f32 %v1464, 0.5
      %v1471 = vmul.f32 %v1467, 0.5
      %v1472 = vmul.f32 %v1464, 0.044715
      %v1473 = vmul.f32 %v1467, 0.044715
      %v1474 = vmul.f32 %v1472, %v1464
      %v1475 = vmul.f32 %v1473, %v1467
      %v1476 = vmul.f32 %v1474, %v1464
      %v1477 = vmul.f32 %v1475, %v1467
      %v1478 = vadd.f32 %v1464, %v1476
      %v1479 = vadd.f32 %v1467, %v1477
      %v1480 = vmul.f32 %v1478, 0.7978846
      %v1481 = vmul.f32 %v1479, 0.7978846
      %v1482 = vtanh.pop %v1480
      %v1483 = vtanh.pop %v1481
      %v1484 = vadd.f32 %v1482, 1.0
      %v1485 = vadd.f32 %v1483, 1.0
      %v1486 = vmul.f32 %v1470, %v1484
      %v1487 = vmul.f32 %v1471, %v1485
      %v1488 = vpack.c.bf16 %v1487, %v1486
      %v1489 = vld [vmem:[%s702] sm:$0xf]
      %v1490 = vld [vmem:[%s702 + $0x4] sm:$0xf]
      %v1491 = vld [vmem:[%s702 + $0x8] sm:$0xf]
      %v1492 = vld [vmem:[%s702 + $0xc] sm:$0xf]
      %v1493 = vld [vmem:[%s702 + $0x10] sm:$0xf]
      %v1494 = vld [vmem:[%s702 + $0x14] sm:$0xf]
      %v1495 = vld [vmem:[%s702 + $0x18] sm:$0xf]
      %v1496 = vld [vmem:[%s702 + $0x1c] sm:$0xf]
      %v1497 = vld [vmem:[%s702 + $0x20] sm:$0xf]
      %v1498 = vld [vmem:[%s702 + $0x24] sm:$0xf]
      %v1499 = vld [vmem:[%s702 + $0x28] sm:$0xf]
      %v1500 = vld [vmem:[%s702 + $0x2c] sm:$0xf]
      %v1501 = vld [vmem:[%s702 + $0x30] sm:$0xf]
      %v1502 = vld [vmem:[%s702 + $0x34] sm:$0xf]
      %v1503 = vld [vmem:[%s702 + $0x38] sm:$0xf]
      %v1504 = vld [vmem:[%s702 + $0x3c] sm:$0xf]
      %v1505 = vld [vmem:[%s705] sm:$0x1]
      %v1507 = vlaneseq
      %v1508 = vshrl.u32 %v1507, 7
      %v1509 = vsub.s32 0, %v1508
      %v1510 = vrot.slane %v1505, %v1509
      %v1528 = vunpack.c.l.b16 %v1489
      %v1529 = vunpack.c.l.b16 %v1490
      %v1530 = vunpack.c.l.b16 %v1491
      %v1531 = vunpack.c.l.b16 %v1492
      %v1532 = vunpack.c.l.b16 %v1493
      %v1533 = vunpack.c.l.b16 %v1494
      %v1534 = vunpack.c.l.b16 %v1495
      %v1535 = vunpack.c.l.b16 %v1496
      %v1536 = vunpack.c.l.b16 %v1497
      %v1537 = vunpack.c.l.b16 %v1498
      %v1538 = vunpack.c.l.b16 %v1499
      %v1539 = vunpack.c.l.b16 %v1500
      %v1540 = vunpack.c.l.b16 %v1501
      %v1541 = vunpack.c.l.b16 %v1502
      %v1542 = vunpack.c.l.b16 %v1503
      %v1543 = vunpack.c.l.b16 %v1504
      %v1544 = vpack.c.b16 %v1529, %v1528
      %v1545 = vpack.c.b16 %v1531, %v1530
      %v1546 = vpack.c.b16 %v1533, %v1532
      %v1547 = vpack.c.b16 %v1535, %v1534
      %v1548 = vpack.c.b16 %v1537, %v1536
      %v1549 = vpack.c.b16 %v1539, %v1538
      %v1550 = vpack.c.b16 %v1541, %v1540
      %v1551 = vpack.c.b16 %v1543, %v1542
      %1560 = vmatprep.subr.bf16.mxu0 0
      %1561 = vmatpush1.bf16.msra.mxu0 %v1551
      %1562 = vmatprep.subr.bf16.mxu0 0
      %1563 = vmatpush1.bf16.msra.mxu0 %v1550
      %1564 = vmatprep.subr.bf16.mxu0 0
      %1565 = vmatpush1.bf16.msra.mxu0 %v1549
      %1566 = vmatprep.subr.bf16.mxu0 0
      %1567 = vmatpush1.bf16.msra.mxu0 %v1548
      %1568 = vmatprep.subr.bf16.mxu0 0
      %1569 = vmatpush1.bf16.msra.mxu0 %v1547
      %1570 = vmatprep.subr.bf16.mxu0 0
      %1571 = vmatpush1.bf16.msra.mxu0 %v1546
      %1572 = vmatprep.subr.bf16.mxu0 0
      %1573 = vmatpush1.bf16.msra.mxu0 %v1545
      %1574 = vmatprep.subr.bf16.mxu0 0
      %1575 = vmatpush1.bf16.msra.mxu0 %v1544
      %1576 = vmatprep.subr.bf16.mxu0 0
      %1577 = vmatpush2.bf16.msra.mxu0 0
      %1578 = vmatprep.subr.bf16.mxu0 0
      %1579 = vmatpush2.bf16.msra.mxu0 0
      %1580 = vmatprep.subr.bf16.mxu0 0
      %1581 = vmatpush2.bf16.msra.mxu0 0
      %1582 = vmatprep.subr.bf16.mxu0 0
      %1583 = vmatpush2.bf16.msra.mxu0 0
      %1584 = vmatprep.subr.bf16.mxu0 0
      %1585 = vmatpush2.bf16.msra.mxu0 0
      %1586 = vmatprep.subr.bf16.mxu0 0
      %1587 = vmatpush2.bf16.msra.mxu0 0
      %1588 = vmatprep.subr.bf16.mxu0 0
      %1589 = vmatpush2.bf16.msra.mxu0 0
      %1590 = vmatprep.subr.bf16.mxu0 0
      %1591 = vmatpush2.bf16.msra.mxu0 0
      %1592 = vmatprep.mubr.bf16.mxu0 0
      %1593 = vmatmul.mubr.bf16.gmra.mxu0 %v1488
      %v1594 = vpop.f32.mrf.mxu0
      %v1595 = vadd.f32 %v1510, %v1594
      %v1596 = vpop.f32.mrf.mxu0
      %v1597 = vpop.f32.mrf.mxu0
      %v1598 = vadd.f32 %v1510, %v1597
      %v1599 = vpop.f32.mrf.mxu0
      %1600 = vdwg.mxu0
      %v1601 = vadd.f32 %v1356, %v1595
      %v1602 = vadd.f32 %v1357, %v1598
      %1603 = vst.msk [vmem:[#allocation2] sm:$0xff] %vm720, %v1601
      %1604 = vst.msk [vmem:[#allocation2 + $0x8] sm:$0xff] %vm720, %v1602
      %p1605 = scmp.eq.s32.totalorder %s28, 1
      // Predicated region
      $region93: #{reward_model_forward.1} parent=87 // pred_check
        %p1606 = pneg %p1605
      $region94: #{reward_model_forward.1} parent=87 // pred_check_branch
        %1608 = sbr.rel (%p1606) target = $region96
      $region95: #{reward_model_forward.1} parent=87 // pred_region
        %v1609 = vld [vmem:[%s14] sm:$0x1]
        %v1610 = vld [vmem:[%s15] sm:$0x1]
        %v1611 = vsel %vm720, %v1601, 0.0
        %1612 = vadd.xlane.f32.xlu0 %v1611
        %v1613 = vpop.xlane.xlu0 %1612
        %v1614 = vsel %vm720, %v1602, 0.0
        %1615 = vadd.xlane.f32.xlu0 %v1614
        %v1616 = vpop.xlane.xlu0 %1615
        %v1617 = vmul.f32 %v1613, %v727
        %v1618 = vmul.f32 %v1616, %v727
        %v1619 = vsub.f32 %v1601, %v1617
        %v1620 = vsub.f32 %v1602, %v1618
        %v1621 = vmul.f32 %v1619, %v1619
        %v1622 = vmul.f32 %v1620, %v1620
        %v1623 = vsel %vm720, %v1621, 0.0
        %1624 = vadd.xlane.f32.xlu0 %v1623
        %v1625 = vpop.xlane.xlu0 %1624
        %v1626 = vsel %vm720, %v1622, 0.0
        %1627 = vadd.xlane.f32.xlu0 %v1626
        %v1628 = vpop.xlane.xlu0 %1627
        %v1629 = vmul.f32 %v1625, %v727
        %v1630 = vmul.f32 %v1628, %v727
        %v1631 = vadd.f32 %v1629, 1e-05
        %v1632 = vadd.f32 %v1630, 1e-05
        %v1633 = vrsqrt.pop %v1631
        %v1634 = vrsqrt.pop %v1632
        %v1635 = vmul.f32 %v1619, %v1633
        %v1636 = vmul.f32 %v1620, %v1634
        %v1638 = vlaneseq
        %v1639 = vshrl.u32 %v1638, 7
        %v1640 = vsub.s32 0, %v1639
        %v1641 = vrot.slane %v1609, %v1640
        %v1643 = vmul.f32 %v1635, %v1641
        %v1644 = vmul.f32 %v1636, %v1641
        %v1646 = vlaneseq
        %v1647 = vshrl.u32 %v1646, 7
        %v1648 = vsub.s32 0, %v1647
        %v1649 = vrot.slane %v1610, %v1648
        %v1651 = vadd.f32 %v1643, %v1649
        %v1652 = vadd.f32 %v1644, %v1649
        %v1653 = vsel %vm720, %v1651, 0.0
        %v1654 = vrot.slane %v1653, 4
        %v1655 = vadd.f32 %v1653, %v1654
        %v1656 = vrot.slane %v1655, 2
        %v1657 = vadd.f32 %v1655, %v1656
        %v1658 = vrot.slane %v1657, 1
        %v1659 = vadd.f32 %v1657, %v1658
        %v1660 = vrcp.pop 8.0
        %v1661 = vmul.f32 %v1659, %v1660
        %v1662 = vld [vmem:[%s16] sm:$0x1]
        %v1663 = vmul.f32 %v1661, %v1662
        %vm1664 = vcmask 253952
        %v1665 = vsel %vm1664, %v1663, 0.0
        %1666 = vadd.xlane.f32.xlu0 %v1665
        %v1667 = vpop.xlane.xlu0 %1666
        %v1668 = vsel %vm720, %v1652, 0.0
        %v1669 = vrot.slane %v1668, 4
        %v1670 = vadd.f32 %v1668, %v1669
        %v1671 = vrot.slane %v1670, 2
        %v1672 = vadd.f32 %v1670, %v1671
        %v1673 = vrot.slane %v1672, 1
        %v1674 = vadd.f32 %v1672, %v1673
        %v1675 = vmul.f32 %v1674, %v1660
        %v1676 = vmul.f32 %v1675, %v1662
        %v1677 = vsel %vm1664, %v1676, 0.0
        %1678 = vadd.xlane.f32.xlu0 %v1677
        %v1679 = vpop.xlane.xlu0 %1678
        %v1681 = vrot.slane %v1679, 7
        %vm1683 = vcmask 1040384
        %v1684 = vsel %vm1683, %v1667, %v1681
        %1686 = vset.pattern.permute.xlu0 0
        %1687 = vperm.xlu0 %1686, %v1684
        %v1688 = vpop.permute.xlu0 %1687
        %1690 = vst [vmem:[%s17] sm:$0x3] %v1688
      $region96: #{reward_model_forward.1} parent=87 // pred_fallthru
        _
      // Predicated region
      $region97: #{reward_model_forward.1} parent=87 // pred_check
        %p1691 = pneg %p458
      $region98: #{reward_model_forward.1} parent=87 // pred_check_branch
        %1693 = sbr.rel (%p1691) target = $region100
      $region99: #{reward_model_forward.1} parent=87 // pred_region
        _
      $region100: #{reward_model_forward.1} parent=87 // pred_fallthru
        _
      // Predicated region
      $region101: #{reward_model_forward.1} parent=87 // pred_check
        %p1694 = pneg %p458
      $region102: #{reward_model_forward.1} parent=87 // pred_check_branch
        %1696 = sbr.rel (%p1694) target = $region104
      $region103: #{reward_model_forward.1} parent=87 // pred_region
        _
      $region104: #{reward_model_forward.1} parent=87 // pred_fallthru
        _
    $region88: #{reward_model_forward.1} parent=5 // pred_fallthru
      _
    %p1697 = scmp.le.s32.totalorder 2, %s23
    // Predicated region
    $region105: #{reward_model_forward.1} parent=5 // pred_check
      %p1698 = pneg %p1697
    $region106: #{reward_model_forward.1} parent=5 // pred_check_branch
      %1700 = sbr.rel (%p1698) target = $region108
    $region107: #{reward_model_forward.1} parent=5 // pred_region
      %s1701 = ssub.s32 %s23, 2
    $region108: #{reward_model_forward.1} parent=5 // pred_fallthru
      _
  $region6: #{reward_model_forward.1} parent=0 // loop_footer
    %s27 = sadd.s32 1, %s23
  $region7: #{reward_model_forward.1} parent=0 // loop_footer_branch
    %22 = sbr.rel target = $region3
  $region8: #{reward_model_forward.1} parent=0 // loop_exit
    _

</llo_original>
